<compile_context>
chip_gen: v7x
topology: tpu7x:2x2x1
jax: 0.10.0
libtpu: 0.0.40
codegen_flags: <defaults>
</compile_context>

<pallas_src>
import numpy as np
import jax
import jax.numpy as jnp
from jax import lax
from jax.experimental import pallas as pl
from jax.experimental.pallas import tpu as pltpu

EPS = 1e-5


# ------------------- host-side weight preparation (numpy) -------------------
def _conv3x3_bands(w_oihw, wo, stride, in_cols, col_pad):
    """Row-banded weights for a 3x3 conv on lane-dense activations.

    Returns (3, in_cols*cin, wo*cout): for kernel row dh, output lane
    (w_out*cout + co) reads input lane (w_in*cin + ci) with
    w_in = stride*w_out + dw - 1 + col_pad (dw in {0,1,2}); out-of-range w_in
    (the width zero padding) simply has no band entry.
    """
    cout, cin = w_oihw.shape[0], w_oihw.shape[1]
    bands = np.zeros((3, in_cols * cin, wo * cout), np.float32)
    w_np = np.asarray(w_oihw)
    for dh in range(3):
        for dw in range(3):
            blk = w_np[:, :, dh, dw].T                       # (cin, cout)
            for w_out in range(wo):
                w_in = stride * w_out + dw - 1 + col_pad
                if 0 <= w_in < in_cols:
                    bands[dh,
                          w_in * cin:(w_in + 1) * cin,
                          w_out * cout:(w_out + 1) * cout] = blk
    return bands


def _conv1x1_band(w_oi, wo, stride, in_cols, col_pad):
    cout, cin = w_oi.shape
    band = np.zeros((in_cols * cin, wo * cout), np.float32)
    blk = np.asarray(w_oi).T                                 # (cin, cout)
    for w_out in range(wo):
        w_in = stride * w_out + col_pad                      # centre tap
        band[w_in * cin:(w_in + 1) * cin,
             w_out * cout:(w_out + 1) * cout] = blk
    return band


def _tile_lane(vec, wo):
    """Per-channel vector -> (1, wo*cout) lane vector (index w*cout + co)."""
    v = np.asarray(vec).reshape(-1)
    return np.tile(v, wo).reshape(1, -1).astype(np.float32)


def prepare_encoder_args(block_params, ds_params, stride, h, w):
    """Build the flat kernel weight-argument list (everything after the input
    slabs), in the exact order the fused kernel consumes them."""
    cin = block_params[0]["w1"].shape[1]
    cout = block_params[0]["w1"].shape[0]
    ho = (h + 2 - 3) // stride + 1
    wo = (w + 2 - 3) // stride + 1
    in_cols0 = w + 2
    has_ds = ds_params is not None
    if not has_ds:
        assert stride == 1 and cin == cout, (
            "identity residual requires stride == 1 and cin == cout")

    args = []
    for b, p in enumerate(block_params):
        if b == 0:
            bands1 = _conv3x3_bands(p["w1"], wo, stride, in_cols0, 1)
        else:
            bands1 = _conv3x3_bands(p["w1"], wo, 1, wo, 0)
        bands2 = _conv3x3_bands(p["w2"], wo, 1, wo, 0)
        cr = p["wfc1"].shape[0]
        # fold the (1/(ho*wo)) mean-over-W pooling into fc1; pre-tile fc2/bfc2
        fc1 = np.tile(np.asarray(p["wfc1"]).T, (wo, 1)) / float(ho * wo)
        fc2 = np.tile(np.asarray(p["wfc2"]).T, (1, wo))
        args += [
            jnp.asarray(bands1, jnp.bfloat16),
            jnp.asarray(_tile_lane(p["bn1_scale"], wo)),
            jnp.asarray(_tile_lane(p["bn1_shift"], wo)),
            jnp.asarray(bands2, jnp.bfloat16),
            jnp.asarray(_tile_lane(p["bn2_scale"], wo)),
            jnp.asarray(_tile_lane(p["bn2_shift"], wo)),
            jnp.asarray(fc1, jnp.float32),
            jnp.asarray(np.asarray(p["bfc1"]).reshape(1, cr), jnp.float32),
            jnp.asarray(fc2, jnp.float32),
            jnp.asarray(_tile_lane(p["bfc2"], wo)),
        ]
        if b == 0 and has_ds:
            wds = np.asarray(ds_params["w"])[:, :, 0, 0]
            args += [
                jnp.asarray(_conv1x1_band(wds, wo, stride, in_cols0, 1),
                            jnp.bfloat16),
                jnp.asarray(_tile_lane(ds_params["bn_scale"], wo)),
                jnp.asarray(_tile_lane(ds_params["bn_shift"], wo)),
            ]

    geom = dict(cin=cin, cout=cout, ho=ho, wo=wo, stride=stride,
                has_ds=has_ds, num_blocks=len(block_params))
    return args, geom


# ----------------------- fused EncoderBlock kernel --------------------------
def make_encoder_kernel(*, num_blocks, has_ds, n, ho, wo, cin, cout):
    m = n * ho
    L = wo * cout

    def kernel(*refs):
        refs = list(refs)
        pad_ref = refs.pop()            # VMEM scratch (m+2, L) f32
        out_ref = refs.pop()            # (m, L) f32
        it = iter(refs)
        slabs_ref = next(it)            # (3, m, (W+2)*cin) bf16

        # hoisted per-sample top/bottom border masks for the dh row shifts
        row = lax.broadcasted_iota(jnp.int32, (m, 1), 0)
        at_top = (row % ho) == 0
        at_bot = (row % ho) == (ho - 1)

        pad_ref[...] = jnp.zeros_like(pad_ref)   # rows 0 and m+1 stay zero

        def conv3x3_s1(h_f32, w_ref):
            """3x3 stride-1 conv on a lane-dense (m, L) f32 activation."""
            pad_ref[1:m + 1, :] = h_f32
            up_in = pad_ref[0:m, :]              # input row h-1  (dh = 0)
            dn_in = pad_ref[2:m + 2, :]          # input row h+1  (dh = 2)
            up_in = jnp.where(at_top, 0.0, up_in).astype(jnp.bfloat16)
            dn_in = jnp.where(at_bot, 0.0, dn_in).astype(jnp.bfloat16)
            acc = jnp.dot(up_in, w_ref[0], preferred_element_type=jnp.float32)
            acc += jnp.dot(h_f32.astype(jnp.bfloat16), w_ref[1],
                           preferred_element_type=jnp.float32)
            acc += jnp.dot(dn_in, w_ref[2], preferred_element_type=jnp.float32)
            return acc

        def conv_tail(c1, s1, b1, w2_ref, s2, b2, fc1, fb1, fc2, fb2):
            """ReLU -> BN1 -> conv2 -> BN2 -> SE  (c1 = raw conv1 output)."""
            h1 = jnp.maximum(c1, 0.0) * s1[...] + b1[...]
            o2 = conv3x3_s1(h1, w2_ref) * s2[...] + b2[...]
            # SE squeeze: per-sample row sum; mean over W folded into fc1.
            rs = jnp.sum(o2.reshape(n, ho, L), axis=1)                   # (n, L)
            hfc = jnp.dot(rs, fc1[...], preferred_element_type=jnp.float32)
            hfc = jnp.maximum(hfc + fb1[...], 0.0)
            z = jnp.dot(hfc, fc2[...],
                        preferred_element_type=jnp.float32) + fb2[...]
            e = 1.0 / (1.0 + jnp.exp(-z))                # exact sigmoid (n, L)
            e_rows = jnp.broadcast_to(e[:, None, :], (n, ho, L)).reshape(m, L)
            return o2 * e_rows

        y = None
        for b in range(num_blocks):
            w1 = next(it); s1 = next(it); b1 = next(it)
            w2 = next(it); s2 = next(it); b2 = next(it)
            fc1 = next(it); fb1 = next(it); fc2 = next(it); fb2 = next(it)
            if b == 0:
                # strided conv1 from the three host-prepared row slabs
                c1 = jnp.dot(slabs_ref[0], w1[0],
                             preferred_element_type=jnp.float32)
                c1 += jnp.dot(slabs_ref[1], w1[1],
                              preferred_element_type=jnp.float32)
                c1 += jnp.dot(slabs_ref[2], w1[2],
                              preferred_element_type=jnp.float32)
                o2 = conv_tail(c1, s1, b1, w2, s2, b2, fc1, fb1, fc2, fb2)
                if has_ds:
                    wds = next(it); sds = next(it); bds = next(it)
                    res = jnp.dot(slabs_ref[1], wds[...],
                                  preferred_element_type=jnp.float32)
                    res = res * sds[...] + bds[...]
                else:
                    # identity residual (stride == 1, cin == cout): the centre
                    # columns of the dh=1 slab are x in lane-dense form.
                    res = slabs_ref[1][:, cin:cin + wo * cin].astype(jnp.float32)
                y = jnp.maximum(o2 + res, 0.0)
            else:
                c1 = conv3x3_s1(y, w1)
                o2 = conv_tail(c1, s1, b1, w2, s2, b2, fc1, fb1, fc2, fb2)
                y = jnp.maximum(o2 + y, 0.0)

        out_ref[...] = y                         # single lane-dense store

    return kernel


# ------------------------------ host wrapper ---------------------------------
def encoder_block_forward(x_nhwc, weight_args, geom):
    n, h, w, cin = x_nhwc.shape
    ho, wo, cout, stride = geom["ho"], geom["wo"], geom["cout"], geom["stride"]
    m = n * ho
    L = wo * cout
    in_cols = w + 2

    # Three strided row slabs of the zero-padded input (lane-dense), one per
    # kernel row dh; they feed block-0 conv1 and the 1x1 downsample (dh=1).
    xp = jnp.pad(x_nhwc, ((0, 0), (1, 1), (1, 1), (0, 0)))
    slabs = jnp.stack(
        [xp[:, dh:dh + stride * (ho - 1) + 1:stride, :, :]
           .reshape(n, ho, in_cols * cin)
         for dh in range(3)], axis=0)
    slabs = slabs.reshape(3, m, in_cols * cin).astype(jnp.bfloat16)

    kernel = make_encoder_kernel(num_blocks=geom["num_blocks"],
                                 has_ds=geom["has_ds"],
                                 n=n, ho=ho, wo=wo, cin=cin, cout=cout)
    args = [slabs] + list(weight_args)
    vmem = pl.BlockSpec(memory_space=pltpu.MemorySpace.VMEM)

    out = pl.pallas_call(
        kernel,
        out_shape=jax.ShapeDtypeStruct((m, L), jnp.float32),
        in_specs=[vmem] * len(args),
        out_specs=vmem,
        scratch_shapes=[pltpu.VMEM((m + 2, L), jnp.float32)],
    )(*args)
    return out.reshape(n, ho, wo, cout)


# ----------------------------- parameter init --------------------------------
def init_bn(key, c):
    k1, k2, k3, k4 = jax.random.split(key, 4)
    gamma = 1.0 + 0.1 * jax.random.normal(k1, (c,))
    beta = 0.1 * jax.random.normal(k2, (c,))
    mean = 0.1 * jax.random.normal(k3, (c,))
    var = 0.5 + jax.random.uniform(k4, (c,))
    scale = gamma / jnp.sqrt(var + EPS)
    shift = beta - mean * scale
    return scale.astype(jnp.float32), shift.astype(jnp.float32)


def init_se_block(key, cin, cout, reduction=8):
    cr = cout // reduction
    ks = jax.random.split(key, 8)
    s1, b1 = init_bn(ks[2], cout)
    s2, b2 = init_bn(ks[3], cout)
    return dict(
        w1=0.1 * jax.random.normal(ks[0], (cout, cin, 3, 3), jnp.float32),
        w2=0.1 * jax.random.normal(ks[1], (cout, cout, 3, 3), jnp.float32),
        bn1_scale=s1, bn1_shift=b1, bn2_scale=s2, bn2_shift=b2,
        wfc1=0.1 * jax.random.normal(ks[4], (cr, cout), jnp.float32),
        bfc1=0.1 * jax.random.normal(ks[5], (cr,), jnp.float32),
        wfc2=0.1 * jax.random.normal(ks[6], (cout, cr), jnp.float32),
        bfc2=0.1 * jax.random.normal(ks[7], (cout,), jnp.float32),
    )


def init_downsample(key, cin, cout):
    k1, k2 = jax.random.split(key)
    s, b = init_bn(k2, cout)
    return dict(w=0.1 * jax.random.normal(k1, (cout, cin, 1, 1), jnp.float32),
                bn_scale=s, bn_shift=b)


# ---------------------------- pure-JAX reference -----------------------------
def _conv_ref(x, w_oihw, stride, pad):
    w_hwio = jnp.transpose(w_oihw, (2, 3, 1, 0))
    return lax.conv_general_dilated(
        x, w_hwio, (stride, stride), ((pad, pad), (pad, pad)),
        dimension_numbers=("NHWC", "HWIO", "NHWC"),
        precision=lax.Precision.HIGHEST)


def se_block_ref(x, p, stride, ds):
    y = _conv_ref(x, p["w1"], stride, 1)
    y = jnp.maximum(y, 0.0)
    y = y * p["bn1_scale"] + p["bn1_shift"]
    y = _conv_ref(y, p["w2"], 1, 1)
    y = y * p["bn2_scale"] + p["bn2_shift"]
    se = jnp.mean(y, axis=(1, 2))
    se = jnp.maximum(se @ p["wfc1"].T + p["bfc1"], 0.0)
    se = jax.nn.sigmoid(se @ p["wfc2"].T + p["bfc2"])
    y = y * se[:, None, None, :]
    if ds is not None:
        r = _conv_ref(x, ds["w"], stride, 0)
        r = r * ds["bn_scale"] + ds["bn_shift"]
    else:
        r = x
    return jnp.maximum(y + r, 0.0)


def encoder_ref(x, block_params, ds_params, stride):
    out = se_block_ref(x, block_params[0], stride, ds_params)
    for p in block_params[1:]:
        out = se_block_ref(out, p, 1, None)
    return out


# ---------------------------------- main --------------------------------------
if __name__ == "__main__":
    # EncoderBlock(in_channel=4, out_channel=16, num_blocks=2, stride=2)
    N, CIN, H, W = 2, 4, 16, 16
    COUT, NUM_BLOCKS, STRIDE = 16, 2, 2

    root = jax.random.PRNGKey(0)
    kx, kb0, kb1, kds = jax.random.split(root, 4)

    x_nchw = jax.random.normal(kx, (N, CIN, H, W), dtype=jnp.float32)
    x_nhwc = jnp.transpose(x_nchw, (0, 2, 3, 1))

    block_params = [init_se_block(kb0, CIN, COUT),
                    init_se_block(kb1, COUT, COUT)][:NUM_BLOCKS]
    ds_params = init_downsample(kds, CIN, COUT)   # stride>1 / cin!=cout

    weight_args, geom = prepare_encoder_args(block_params, ds_params,
                                             STRIDE, H, W)

    fwd = jax.jit(lambda x, wargs: encoder_block_forward(x, wargs, geom))
    out = jax.block_until_ready(fwd(x_nhwc, weight_args))

    ref = encoder_ref(x_nhwc, block_params, ds_params, STRIDE)
    assert out.shape == (N, H // STRIDE, W // STRIDE, COUT), out.shape
    max_err = float(jnp.max(jnp.abs(out - ref)))
    assert jnp.allclose(out, ref, rtol=2e-2, atol=2e-2), max_err

    print("KERNEL_OK")
</pallas_src>

<mosaic_0001>
module attributes {stable_mosaic.version = 11 : i64} {
  func.func @kernel(%arg0: memref<3x16x72xbf16, #tpu.memory_space<vmem>>, %arg1: memref<3x72x128xbf16, #tpu.memory_space<vmem>>, %arg2: memref<1x128xf32, #tpu.memory_space<vmem>>, %arg3: memref<1x128xf32, #tpu.memory_space<vmem>>, %arg4: memref<3x128x128xbf16, #tpu.memory_space<vmem>>, %arg5: memref<1x128xf32, #tpu.memory_space<vmem>>, %arg6: memref<1x128xf32, #tpu.memory_space<vmem>>, %arg7: memref<128x2xf32, #tpu.memory_space<vmem>>, %arg8: memref<1x2xf32, #tpu.memory_space<vmem>>, %arg9: memref<2x128xf32, #tpu.memory_space<vmem>>, %arg10: memref<1x128xf32, #tpu.memory_space<vmem>>, %arg11: memref<72x128xbf16, #tpu.memory_space<vmem>>, %arg12: memref<1x128xf32, #tpu.memory_space<vmem>>, %arg13: memref<1x128xf32, #tpu.memory_space<vmem>>, %arg14: memref<3x128x128xbf16, #tpu.memory_space<vmem>>, %arg15: memref<1x128xf32, #tpu.memory_space<vmem>>, %arg16: memref<1x128xf32, #tpu.memory_space<vmem>>, %arg17: memref<3x128x128xbf16, #tpu.memory_space<vmem>>, %arg18: memref<1x128xf32, #tpu.memory_space<vmem>>, %arg19: memref<1x128xf32, #tpu.memory_space<vmem>>, %arg20: memref<128x2xf32, #tpu.memory_space<vmem>>, %arg21: memref<1x2xf32, #tpu.memory_space<vmem>>, %arg22: memref<2x128xf32, #tpu.memory_space<vmem>>, %arg23: memref<1x128xf32, #tpu.memory_space<vmem>>, %arg24: memref<16x128xf32, #tpu.memory_space<vmem>>, %arg25: memref<18x128xf32, #tpu.memory_space<vmem>>) attributes {dimension_semantics = [], scalar_prefetch = 0 : i64, scratch_operands = 1 : i64, tpu.core_type = #tpu.core_type<tc>} {
    %0 = tpu.iota {dimensions = array<i32: 0>} : vector<16x1xi32>
    %c8_i32 = arith.constant 8 : i32
    %c0_i32 = arith.constant 0 : i32
    %1 = arith.cmpi eq, %c8_i32, %c0_i32 : i32
    %c1_i32 = arith.constant 1 : i32
    %2 = arith.select %1, %c1_i32, %c8_i32 : i32
    %3 = vector.broadcast %2 : i32 to vector<16x1xi32>
    %4 = arith.remsi %0, %3 : vector<16x1xi32>
    %c0_i32_0 = arith.constant 0 : i32
    %5 = vector.broadcast %c0_i32_0 : i32 to vector<16x1xi32>
    %6 = arith.cmpi ne, %4, %5 : vector<16x1xi32>
    %c0_i32_1 = arith.constant 0 : i32
    %7 = vector.broadcast %c0_i32_1 : i32 to vector<16x1xi32>
    %8 = arith.cmpi slt, %4, %7 : vector<16x1xi32>
    %c0_i32_2 = arith.constant 0 : i32
    %9 = arith.cmpi slt, %2, %c0_i32_2 : i32
    %10 = vector.broadcast %9 : i1 to vector<16x1xi1>
    %11 = vector.broadcast %10 : vector<16x1xi1> to vector<16x1xi1>
    %12 = arith.xori %8, %11 : vector<16x1xi1>
    %13 = arith.andi %12, %6 : vector<16x1xi1>
    %14 = vector.broadcast %2 : i32 to vector<16x1xi32>
    %15 = arith.addi %4, %14 : vector<16x1xi32>
    %16 = arith.select %13, %15, %4 : vector<16x1xi1>, vector<16x1xi32>
    %c0_i32_3 = arith.constant 0 : i32
    %17 = vector.broadcast %c0_i32_3 : i32 to vector<16x1xi32>
    %18 = arith.cmpi eq, %16, %17 : vector<16x1xi32>
    %c8_i32_4 = arith.constant 8 : i32
    %c0_i32_5 = arith.constant 0 : i32
    %19 = arith.cmpi eq, %c8_i32_4, %c0_i32_5 : i32
    %c1_i32_6 = arith.constant 1 : i32
    %20 = arith.select %19, %c1_i32_6, %c8_i32_4 : i32
    %21 = vector.broadcast %20 : i32 to vector<16x1xi32>
    %22 = arith.remsi %0, %21 : vector<16x1xi32>
    %c0_i32_7 = arith.constant 0 : i32
    %23 = vector.broadcast %c0_i32_7 : i32 to vector<16x1xi32>
    %24 = arith.cmpi ne, %22, %23 : vector<16x1xi32>
    %c0_i32_8 = arith.constant 0 : i32
    %25 = vector.broadcast %c0_i32_8 : i32 to vector<16x1xi32>
    %26 = arith.cmpi slt, %22, %25 : vector<16x1xi32>
    %c0_i32_9 = arith.constant 0 : i32
    %27 = arith.cmpi slt, %20, %c0_i32_9 : i32
    %28 = vector.broadcast %27 : i1 to vector<16x1xi1>
    %29 = vector.broadcast %28 : vector<16x1xi1> to vector<16x1xi1>
    %30 = arith.xori %26, %29 : vector<16x1xi1>
    %31 = arith.andi %30, %24 : vector<16x1xi1>
    %32 = vector.broadcast %20 : i32 to vector<16x1xi32>
    %33 = arith.addi %22, %32 : vector<16x1xi32>
    %34 = arith.select %31, %33, %22 : vector<16x1xi1>, vector<16x1xi32>
    %c7_i32 = arith.constant 7 : i32
    %35 = vector.broadcast %c7_i32 : i32 to vector<16x1xi32>
    %36 = arith.cmpi eq, %34, %35 : vector<16x1xi32>
    %cst = arith.constant 0.000000e+00 : f32
    %37 = vector.broadcast %cst : f32 to vector<18x128xf32>
    %c0 = arith.constant 0 : index
    %c0_10 = arith.constant 0 : index
    %38 = vector.load %arg25[%c0, %c0_10] : memref<18x128xf32, #tpu.memory_space<vmem>>, vector<18x128xf32>
    tpu.vector_store %arg25[%c0, %c0_10], %37 {strides = array<i32>} : memref<18x128xf32, #tpu.memory_space<vmem>>, vector<18x128xf32>,
    %c0_11 = arith.constant 0 : index
    %c0_12 = arith.constant 0 : index
    %c0_13 = arith.constant 0 : index
    %39 = vector.load %arg0[%c0_11, %c0_12, %c0_13] : memref<3x16x72xbf16, #tpu.memory_space<vmem>>, vector<1x16x72xbf16>
    %40 = vector.shape_cast %39 : vector<1x16x72xbf16> to vector<16x72xbf16>
    %c0_14 = arith.constant 0 : index
    %c0_15 = arith.constant 0 : index
    %c0_16 = arith.constant 0 : index
    %41 = vector.load %arg1[%c0_14, %c0_15, %c0_16] : memref<3x72x128xbf16, #tpu.memory_space<vmem>>, vector<1x72x128xbf16>
    %42 = vector.shape_cast %41 : vector<1x72x128xbf16> to vector<72x128xbf16>
    %cst_17 = arith.constant dense<0.000000e+00> : vector<16x128xf32>
    %43 = tpu.matmul %40, %42, %cst_17 {dimension_numbers = #tpu.dot_dimension_numbers<[1], [0], [0], [1], [0, 0, 1, 1], [], []>} : vector<16x72xbf16>, vector<72x128xbf16>, vector<16x128xf32> -> vector<16x128xf32>
    %c1 = arith.constant 1 : index
    %c0_18 = arith.constant 0 : index
    %c0_19 = arith.constant 0 : index
    %44 = vector.load %arg0[%c1, %c0_18, %c0_19] : memref<3x16x72xbf16, #tpu.memory_space<vmem>>, vector<1x16x72xbf16>
    %45 = vector.shape_cast %44 : vector<1x16x72xbf16> to vector<16x72xbf16>
    %c1_20 = arith.constant 1 : index
    %c0_21 = arith.constant 0 : index
    %c0_22 = arith.constant 0 : index
    %46 = vector.load %arg1[%c1_20, %c0_21, %c0_22] : memref<3x72x128xbf16, #tpu.memory_space<vmem>>, vector<1x72x128xbf16>
    %47 = vector.shape_cast %46 : vector<1x72x128xbf16> to vector<72x128xbf16>
    %cst_23 = arith.constant dense<0.000000e+00> : vector<16x128xf32>
    %48 = tpu.matmul %45, %47, %cst_23 {dimension_numbers = #tpu.dot_dimension_numbers<[1], [0], [0], [1], [0, 0, 1, 1], [], []>} : vector<16x72xbf16>, vector<72x128xbf16>, vector<16x128xf32> -> vector<16x128xf32>
    %49 = arith.addf %43, %48 : vector<16x128xf32>
    %c2 = arith.constant 2 : index
    %c0_24 = arith.constant 0 : index
    %c0_25 = arith.constant 0 : index
    %50 = vector.load %arg0[%c2, %c0_24, %c0_25] : memref<3x16x72xbf16, #tpu.memory_space<vmem>>, vector<1x16x72xbf16>
    %51 = vector.shape_cast %50 : vector<1x16x72xbf16> to vector<16x72xbf16>
    %c2_26 = arith.constant 2 : index
    %c0_27 = arith.constant 0 : index
    %c0_28 = arith.constant 0 : index
    %52 = vector.load %arg1[%c2_26, %c0_27, %c0_28] : memref<3x72x128xbf16, #tpu.memory_space<vmem>>, vector<1x72x128xbf16>
    %53 = vector.shape_cast %52 : vector<1x72x128xbf16> to vector<72x128xbf16>
    %cst_29 = arith.constant dense<0.000000e+00> : vector<16x128xf32>
    %54 = tpu.matmul %51, %53, %cst_29 {dimension_numbers = #tpu.dot_dimension_numbers<[1], [0], [0], [1], [0, 0, 1, 1], [], []>} : vector<16x72xbf16>, vector<72x128xbf16>, vector<16x128xf32> -> vector<16x128xf32>
    %55 = arith.addf %49, %54 : vector<16x128xf32>
    %cst_30 = arith.constant 0.000000e+00 : f32
    %56 = vector.broadcast %cst_30 : f32 to vector<16x128xf32>
    %57 = arith.maximumf %55, %56 : vector<16x128xf32>
    %c0_31 = arith.constant 0 : index
    %c0_32 = arith.constant 0 : index
    %58 = vector.load %arg2[%c0_31, %c0_32] : memref<1x128xf32, #tpu.memory_space<vmem>>, vector<1x128xf32>
    %59 = vector.broadcast %58 : vector<1x128xf32> to vector<16x128xf32>
    %60 = arith.mulf %57, %59 : vector<16x128xf32>
    %c0_33 = arith.constant 0 : index
    %c0_34 = arith.constant 0 : index
    %61 = vector.load %arg3[%c0_33, %c0_34] : memref<1x128xf32, #tpu.memory_space<vmem>>, vector<1x128xf32>
    %62 = vector.broadcast %61 : vector<1x128xf32> to vector<16x128xf32>
    %63 = arith.addf %60, %62 : vector<16x128xf32>
    %c1_35 = arith.constant 1 : index
    %c0_36 = arith.constant 0 : index
    %64 = vector.load %arg25[%c1_35, %c0_36] : memref<18x128xf32, #tpu.memory_space<vmem>>, vector<16x128xf32>
    tpu.vector_store %arg25[%c1_35, %c0_36], %63 {strides = array<i32>} : memref<18x128xf32, #tpu.memory_space<vmem>>, vector<16x128xf32>,
    %c0_37 = arith.constant 0 : index
    %c0_38 = arith.constant 0 : index
    %65 = vector.load %arg25[%c0_37, %c0_38] : memref<18x128xf32, #tpu.memory_space<vmem>>, vector<16x128xf32>
    %c2_39 = arith.constant 2 : index
    %c0_40 = arith.constant 0 : index
    %66 = vector.load %arg25[%c2_39, %c0_40] : memref<18x128xf32, #tpu.memory_space<vmem>>, vector<16x128xf32>
    %cst_41 = arith.constant 0.000000e+00 : f32
    %67 = vector.shape_cast %18 : vector<16x1xi1> to vector<16x1xi1>
    %68 = vector.broadcast %67 : vector<16x1xi1> to vector<16x128xi1>
    %69 = vector.broadcast %cst_41 : f32 to vector<16x128xf32>
    %70 = arith.select %68, %69, %65 : vector<16x128xi1>, vector<16x128xf32>
    %71 = arith.truncf %70 : vector<16x128xf32> to vector<16x128xbf16>
    %cst_42 = arith.constant 0.000000e+00 : f32
    %72 = vector.shape_cast %36 : vector<16x1xi1> to vector<16x1xi1>
    %73 = vector.broadcast %72 : vector<16x1xi1> to vector<16x128xi1>
    %74 = vector.broadcast %cst_42 : f32 to vector<16x128xf32>
    %75 = arith.select %73, %74, %66 : vector<16x128xi1>, vector<16x128xf32>
    %76 = arith.truncf %75 : vector<16x128xf32> to vector<16x128xbf16>
    %c0_43 = arith.constant 0 : index
    %c0_44 = arith.constant 0 : index
    %c0_45 = arith.constant 0 : index
    %77 = vector.load %arg4[%c0_43, %c0_44, %c0_45] : memref<3x128x128xbf16, #tpu.memory_space<vmem>>, vector<1x128x128xbf16>
    %78 = vector.shape_cast %77 : vector<1x128x128xbf16> to vector<128x128xbf16>
    %cst_46 = arith.constant dense<0.000000e+00> : vector<16x128xf32>
    %79 = tpu.matmul %71, %78, %cst_46 {dimension_numbers = #tpu.dot_dimension_numbers<[1], [0], [0], [1], [0, 0, 1, 1], [], []>} : vector<16x128xbf16>, vector<128x128xbf16>, vector<16x128xf32> -> vector<16x128xf32>
    %80 = arith.truncf %63 : vector<16x128xf32> to vector<16x128xbf16>
    %c1_47 = arith.constant 1 : index
    %c0_48 = arith.constant 0 : index
    %c0_49 = arith.constant 0 : index
    %81 = vector.load %arg4[%c1_47, %c0_48, %c0_49] : memref<3x128x128xbf16, #tpu.memory_space<vmem>>, vector<1x128x128xbf16>
    %82 = vector.shape_cast %81 : vector<1x128x128xbf16> to vector<128x128xbf16>
    %cst_50 = arith.constant dense<0.000000e+00> : vector<16x128xf32>
    %83 = tpu.matmul %80, %82, %cst_50 {dimension_numbers = #tpu.dot_dimension_numbers<[1], [0], [0], [1], [0, 0, 1, 1], [], []>} : vector<16x128xbf16>, vector<128x128xbf16>, vector<16x128xf32> -> vector<16x128xf32>
    %84 = arith.addf %79, %83 : vector<16x128xf32>
    %c2_51 = arith.constant 2 : index
    %c0_52 = arith.constant 0 : index
    %c0_53 = arith.constant 0 : index
    %85 = vector.load %arg4[%c2_51, %c0_52, %c0_53] : memref<3x128x128xbf16, #tpu.memory_space<vmem>>, vector<1x128x128xbf16>
    %86 = vector.shape_cast %85 : vector<1x128x128xbf16> to vector<128x128xbf16>
    %cst_54 = arith.constant dense<0.000000e+00> : vector<16x128xf32>
    %87 = tpu.matmul %76, %86, %cst_54 {dimension_numbers = #tpu.dot_dimension_numbers<[1], [0], [0], [1], [0, 0, 1, 1], [], []>} : vector<16x128xbf16>, vector<128x128xbf16>, vector<16x128xf32> -> vector<16x128xf32>
    %88 = arith.addf %84, %87 : vector<16x128xf32>
    %c0_55 = arith.constant 0 : index
    %c0_56 = arith.constant 0 : index
    %89 = vector.load %arg5[%c0_55, %c0_56] : memref<1x128xf32, #tpu.memory_space<vmem>>, vector<1x128xf32>
    %90 = vector.broadcast %89 : vector<1x128xf32> to vector<16x128xf32>
    %91 = arith.mulf %88, %90 : vector<16x128xf32>
    %c0_57 = arith.constant 0 : index
    %c0_58 = arith.constant 0 : index
    %92 = vector.load %arg6[%c0_57, %c0_58] : memref<1x128xf32, #tpu.memory_space<vmem>>, vector<1x128xf32>
    %93 = vector.broadcast %92 : vector<1x128xf32> to vector<16x128xf32>
    %94 = arith.addf %91, %93 : vector<16x128xf32>
    %95 = vector.shape_cast %94 : vector<16x128xf32> to vector<2x8x128xf32>
    %cst_59 = arith.constant dense<0.000000e+00> : vector<2x128xf32>
    %96 = vector.multi_reduction <add>, %95, %cst_59 [1] : vector<2x8x128xf32> to vector<2x128xf32>
    %c0_60 = arith.constant 0 : index
    %c0_61 = arith.constant 0 : index
    %97 = vector.load %arg7[%c0_60, %c0_61] : memref<128x2xf32, #tpu.memory_space<vmem>>, vector<128x2xf32>
    %cst_62 = arith.constant dense<0.000000e+00> : vector<2x2xf32>
    %98 = tpu.matmul %96, %97, %cst_62 {dimension_numbers = #tpu.dot_dimension_numbers<[1], [0], [0], [1], [0, 0, 1, 1], [], []>} : vector<2x128xf32>, vector<128x2xf32>, vector<2x2xf32> -> vector<2x2xf32>
    %c0_63 = arith.constant 0 : index
    %c0_64 = arith.constant 0 : index
    %99 = vector.load %arg8[%c0_63, %c0_64] : memref<1x2xf32, #tpu.memory_space<vmem>>, vector<1x2xf32>
    %100 = vector.broadcast %99 : vector<1x2xf32> to vector<2x2xf32>
    %101 = arith.addf %98, %100 : vector<2x2xf32>
    %cst_65 = arith.constant 0.000000e+00 : f32
    %102 = vector.broadcast %cst_65 : f32 to vector<2x2xf32>
    %103 = arith.maximumf %101, %102 : vector<2x2xf32>
    %c0_66 = arith.constant 0 : index
    %c0_67 = arith.constant 0 : index
    %104 = vector.load %arg9[%c0_66, %c0_67] : memref<2x128xf32, #tpu.memory_space<vmem>>, vector<2x128xf32>
    %cst_68 = arith.constant dense<0.000000e+00> : vector<2x128xf32>
    %105 = tpu.matmul %103, %104, %cst_68 {dimension_numbers = #tpu.dot_dimension_numbers<[1], [0], [0], [1], [0, 0, 1, 1], [], []>} : vector<2x2xf32>, vector<2x128xf32>, vector<2x128xf32> -> vector<2x128xf32>
    %c0_69 = arith.constant 0 : index
    %c0_70 = arith.constant 0 : index
    %106 = vector.load %arg10[%c0_69, %c0_70] : memref<1x128xf32, #tpu.memory_space<vmem>>, vector<1x128xf32>
    %107 = vector.broadcast %106 : vector<1x128xf32> to vector<2x128xf32>
    %108 = arith.addf %105, %107 : vector<2x128xf32>
    %cst_71 = arith.constant 0.000000e+00 : f32
    %109 = vector.broadcast %cst_71 : f32 to vector<2x128xf32>
    %110 = arith.subf %109, %108 : vector<2x128xf32>
    %111 = math.exp %110 : vector<2x128xf32>
    %cst_72 = arith.constant 1.000000e+00 : f32
    %112 = vector.broadcast %cst_72 : f32 to vector<2x128xf32>
    %113 = arith.addf %112, %111 : vector<2x128xf32>
    %cst_73 = arith.constant 1.000000e+00 : f32
    %114 = vector.broadcast %cst_73 : f32 to vector<2x128xf32>
    %115 = arith.divf %114, %113 : vector<2x128xf32>
    %116 = vector.shape_cast %115 : vector<2x128xf32> to vector<2x1x128xf32>
    %117 = vector.shape_cast %116 : vector<2x1x128xf32> to vector<2x1x128xf32>
    %118 = vector.broadcast %117 : vector<2x1x128xf32> to vector<2x8x128xf32>
    %119 = vector.shape_cast %118 : vector<2x8x128xf32> to vector<16x128xf32>
    %120 = arith.mulf %94, %119 : vector<16x128xf32>
    %c1_74 = arith.constant 1 : index
    %c0_75 = arith.constant 0 : index
    %c0_76 = arith.constant 0 : index
    %121 = vector.load %arg0[%c1_74, %c0_75, %c0_76] : memref<3x16x72xbf16, #tpu.memory_space<vmem>>, vector<1x16x72xbf16>
    %122 = vector.shape_cast %121 : vector<1x16x72xbf16> to vector<16x72xbf16>
    %c0_77 = arith.constant 0 : index
    %c0_78 = arith.constant 0 : index
    %123 = vector.load %arg11[%c0_77, %c0_78] : memref<72x128xbf16, #tpu.memory_space<vmem>>, vector<72x128xbf16>
    %cst_79 = arith.constant dense<0.000000e+00> : vector<16x128xf32>
    %124 = tpu.matmul %122, %123, %cst_79 {dimension_numbers = #tpu.dot_dimension_numbers<[1], [0], [0], [1], [0, 0, 1, 1], [], []>} : vector<16x72xbf16>, vector<72x128xbf16>, vector<16x128xf32> -> vector<16x128xf32>
    %c0_80 = arith.constant 0 : index
    %c0_81 = arith.constant 0 : index
    %125 = vector.load %arg12[%c0_80, %c0_81] : memref<1x128xf32, #tpu.memory_space<vmem>>, vector<1x128xf32>
    %126 = vector.broadcast %125 : vector<1x128xf32> to vector<16x128xf32>
    %127 = arith.mulf %124, %126 : vector<16x128xf32>
    %c0_82 = arith.constant 0 : index
    %c0_83 = arith.constant 0 : index
    %128 = vector.load %arg13[%c0_82, %c0_83] : memref<1x128xf32, #tpu.memory_space<vmem>>, vector<1x128xf32>
    %129 = vector.broadcast %128 : vector<1x128xf32> to vector<16x128xf32>
    %130 = arith.addf %127, %129 : vector<16x128xf32>
    %131 = arith.addf %120, %130 : vector<16x128xf32>
    %cst_84 = arith.constant 0.000000e+00 : f32
    %132 = vector.broadcast %cst_84 : f32 to vector<16x128xf32>
    %133 = arith.maximumf %131, %132 : vector<16x128xf32>
    %c1_85 = arith.constant 1 : index
    %c0_86 = arith.constant 0 : index
    %134 = vector.load %arg25[%c1_85, %c0_86] : memref<18x128xf32, #tpu.memory_space<vmem>>, vector<16x128xf32>
    tpu.vector_store %arg25[%c1_85, %c0_86], %133 {strides = array<i32>} : memref<18x128xf32, #tpu.memory_space<vmem>>, vector<16x128xf32>,
    %c0_87 = arith.constant 0 : index
    %c0_88 = arith.constant 0 : index
    %135 = vector.load %arg25[%c0_87, %c0_88] : memref<18x128xf32, #tpu.memory_space<vmem>>, vector<16x128xf32>
    %c2_89 = arith.constant 2 : index
    %c0_90 = arith.constant 0 : index
    %136 = vector.load %arg25[%c2_89, %c0_90] : memref<18x128xf32, #tpu.memory_space<vmem>>, vector<16x128xf32>
    %cst_91 = arith.constant 0.000000e+00 : f32
    %137 = vector.shape_cast %18 : vector<16x1xi1> to vector<16x1xi1>
    %138 = vector.broadcast %137 : vector<16x1xi1> to vector<16x128xi1>
    %139 = vector.broadcast %cst_91 : f32 to vector<16x128xf32>
    %140 = arith.select %138, %139, %135 : vector<16x128xi1>, vector<16x128xf32>
    %141 = arith.truncf %140 : vector<16x128xf32> to vector<16x128xbf16>
    %cst_92 = arith.constant 0.000000e+00 : f32
    %142 = vector.shape_cast %36 : vector<16x1xi1> to vector<16x1xi1>
    %143 = vector.broadcast %142 : vector<16x1xi1> to vector<16x128xi1>
    %144 = vector.broadcast %cst_92 : f32 to vector<16x128xf32>
    %145 = arith.select %143, %144, %136 : vector<16x128xi1>, vector<16x128xf32>
    %146 = arith.truncf %145 : vector<16x128xf32> to vector<16x128xbf16>
    %c0_93 = arith.constant 0 : index
    %c0_94 = arith.constant 0 : index
    %c0_95 = arith.constant 0 : index
    %147 = vector.load %arg14[%c0_93, %c0_94, %c0_95] : memref<3x128x128xbf16, #tpu.memory_space<vmem>>, vector<1x128x128xbf16>
    %148 = vector.shape_cast %147 : vector<1x128x128xbf16> to vector<128x128xbf16>
    %cst_96 = arith.constant dense<0.000000e+00> : vector<16x128xf32>
    %149 = tpu.matmul %141, %148, %cst_96 {dimension_numbers = #tpu.dot_dimension_numbers<[1], [0], [0], [1], [0, 0, 1, 1], [], []>} : vector<16x128xbf16>, vector<128x128xbf16>, vector<16x128xf32> -> vector<16x128xf32>
    %150 = arith.truncf %133 : vector<16x128xf32> to vector<16x128xbf16>
    %c1_97 = arith.constant 1 : index
    %c0_98 = arith.constant 0 : index
    %c0_99 = arith.constant 0 : index
    %151 = vector.load %arg14[%c1_97, %c0_98, %c0_99] : memref<3x128x128xbf16, #tpu.memory_space<vmem>>, vector<1x128x128xbf16>
    %152 = vector.shape_cast %151 : vector<1x128x128xbf16> to vector<128x128xbf16>
    %cst_100 = arith.constant dense<0.000000e+00> : vector<16x128xf32>
    %153 = tpu.matmul %150, %152, %cst_100 {dimension_numbers = #tpu.dot_dimension_numbers<[1], [0], [0], [1], [0, 0, 1, 1], [], []>} : vector<16x128xbf16>, vector<128x128xbf16>, vector<16x128xf32> -> vector<16x128xf32>
    %154 = arith.addf %149, %153 : vector<16x128xf32>
    %c2_101 = arith.constant 2 : index
    %c0_102 = arith.constant 0 : index
    %c0_103 = arith.constant 0 : index
    %155 = vector.load %arg14[%c2_101, %c0_102, %c0_103] : memref<3x128x128xbf16, #tpu.memory_space<vmem>>, vector<1x128x128xbf16>
    %156 = vector.shape_cast %155 : vector<1x128x128xbf16> to vector<128x128xbf16>
    %cst_104 = arith.constant dense<0.000000e+00> : vector<16x128xf32>
    %157 = tpu.matmul %146, %156, %cst_104 {dimension_numbers = #tpu.dot_dimension_numbers<[1], [0], [0], [1], [0, 0, 1, 1], [], []>} : vector<16x128xbf16>, vector<128x128xbf16>, vector<16x128xf32> -> vector<16x128xf32>
    %158 = arith.addf %154, %157 : vector<16x128xf32>
    %cst_105 = arith.constant 0.000000e+00 : f32
    %159 = vector.broadcast %cst_105 : f32 to vector<16x128xf32>
    %160 = arith.maximumf %158, %159 : vector<16x128xf32>
    %c0_106 = arith.constant 0 : index
    %c0_107 = arith.constant 0 : index
    %161 = vector.load %arg15[%c0_106, %c0_107] : memref<1x128xf32, #tpu.memory_space<vmem>>, vector<1x128xf32>
    %162 = vector.broadcast %161 : vector<1x128xf32> to vector<16x128xf32>
    %163 = arith.mulf %160, %162 : vector<16x128xf32>
    %c0_108 = arith.constant 0 : index
    %c0_109 = arith.constant 0 : index
    %164 = vector.load %arg16[%c0_108, %c0_109] : memref<1x128xf32, #tpu.memory_space<vmem>>, vector<1x128xf32>
    %165 = vector.broadcast %164 : vector<1x128xf32> to vector<16x128xf32>
    %166 = arith.addf %163, %165 : vector<16x128xf32>
    %c1_110 = arith.constant 1 : index
    %c0_111 = arith.constant 0 : index
    %167 = vector.load %arg25[%c1_110, %c0_111] : memref<18x128xf32, #tpu.memory_space<vmem>>, vector<16x128xf32>
    tpu.vector_store %arg25[%c1_110, %c0_111], %166 {strides = array<i32>} : memref<18x128xf32, #tpu.memory_space<vmem>>, vector<16x128xf32>,
    %c0_112 = arith.constant 0 : index
    %c0_113 = arith.constant 0 : index
    %168 = vector.load %arg25[%c0_112, %c0_113] : memref<18x128xf32, #tpu.memory_space<vmem>>, vector<16x128xf32>
    %c2_114 = arith.constant 2 : index
    %c0_115 = arith.constant 0 : index
    %169 = vector.load %arg25[%c2_114, %c0_115] : memref<18x128xf32, #tpu.memory_space<vmem>>, vector<16x128xf32>
    %cst_116 = arith.constant 0.000000e+00 : f32
    %170 = vector.shape_cast %18 : vector<16x1xi1> to vector<16x1xi1>
    %171 = vector.broadcast %170 : vector<16x1xi1> to vector<16x128xi1>
    %172 = vector.broadcast %cst_116 : f32 to vector<16x128xf32>
    %173 = arith.select %171, %172, %168 : vector<16x128xi1>, vector<16x128xf32>
    %174 = arith.truncf %173 : vector<16x128xf32> to vector<16x128xbf16>
    %cst_117 = arith.constant 0.000000e+00 : f32
    %175 = vector.shape_cast %36 : vector<16x1xi1> to vector<16x1xi1>
    %176 = vector.broadcast %175 : vector<16x1xi1> to vector<16x128xi1>
    %177 = vector.broadcast %cst_117 : f32 to vector<16x128xf32>
    %178 = arith.select %176, %177, %169 : vector<16x128xi1>, vector<16x128xf32>
    %179 = arith.truncf %178 : vector<16x128xf32> to vector<16x128xbf16>
    %c0_118 = arith.constant 0 : index
    %c0_119 = arith.constant 0 : index
    %c0_120 = arith.constant 0 : index
    %180 = vector.load %arg17[%c0_118, %c0_119, %c0_120] : memref<3x128x128xbf16, #tpu.memory_space<vmem>>, vector<1x128x128xbf16>
    %181 = vector.shape_cast %180 : vector<1x128x128xbf16> to vector<128x128xbf16>
    %cst_121 = arith.constant dense<0.000000e+00> : vector<16x128xf32>
    %182 = tpu.matmul %174, %181, %cst_121 {dimension_numbers = #tpu.dot_dimension_numbers<[1], [0], [0], [1], [0, 0, 1, 1], [], []>} : vector<16x128xbf16>, vector<128x128xbf16>, vector<16x128xf32> -> vector<16x128xf32>
    %183 = arith.truncf %166 : vector<16x128xf32> to vector<16x128xbf16>
    %c1_122 = arith.constant 1 : index
    %c0_123 = arith.constant 0 : index
    %c0_124 = arith.constant 0 : index
    %184 = vector.load %arg17[%c1_122, %c0_123, %c0_124] : memref<3x128x128xbf16, #tpu.memory_space<vmem>>, vector<1x128x128xbf16>
    %185 = vector.shape_cast %184 : vector<1x128x128xbf16> to vector<128x128xbf16>
    %cst_125 = arith.constant dense<0.000000e+00> : vector<16x128xf32>
    %186 = tpu.matmul %183, %185, %cst_125 {dimension_numbers = #tpu.dot_dimension_numbers<[1], [0], [0], [1], [0, 0, 1, 1], [], []>} : vector<16x128xbf16>, vector<128x128xbf16>, vector<16x128xf32> -> vector<16x128xf32>
    %187 = arith.addf %182, %186 : vector<16x128xf32>
    %c2_126 = arith.constant 2 : index
    %c0_127 = arith.constant 0 : index
    %c0_128 = arith.constant 0 : index
    %188 = vector.load %arg17[%c2_126, %c0_127, %c0_128] : memref<3x128x128xbf16, #tpu.memory_space<vmem>>, vector<1x128x128xbf16>
    %189 = vector.shape_cast %188 : vector<1x128x128xbf16> to vector<128x128xbf16>
    %cst_129 = arith.constant dense<0.000000e+00> : vector<16x128xf32>
    %190 = tpu.matmul %179, %189, %cst_129 {dimension_numbers = #tpu.dot_dimension_numbers<[1], [0], [0], [1], [0, 0, 1, 1], [], []>} : vector<16x128xbf16>, vector<128x128xbf16>, vector<16x128xf32> -> vector<16x128xf32>
    %191 = arith.addf %187, %190 : vector<16x128xf32>
    %c0_130 = arith.constant 0 : index
    %c0_131 = arith.constant 0 : index
    %192 = vector.load %arg18[%c0_130, %c0_131] : memref<1x128xf32, #tpu.memory_space<vmem>>, vector<1x128xf32>
    %193 = vector.broadcast %192 : vector<1x128xf32> to vector<16x128xf32>
    %194 = arith.mulf %191, %193 : vector<16x128xf32>
    %c0_132 = arith.constant 0 : index
    %c0_133 = arith.constant 0 : index
    %195 = vector.load %arg19[%c0_132, %c0_133] : memref<1x128xf32, #tpu.memory_space<vmem>>, vector<1x128xf32>
    %196 = vector.broadcast %195 : vector<1x128xf32> to vector<16x128xf32>
    %197 = arith.addf %194, %196 : vector<16x128xf32>
    %198 = vector.shape_cast %197 : vector<16x128xf32> to vector<2x8x128xf32>
    %cst_134 = arith.constant dense<0.000000e+00> : vector<2x128xf32>
    %199 = vector.multi_reduction <add>, %198, %cst_134 [1] : vector<2x8x128xf32> to vector<2x128xf32>
    %c0_135 = arith.constant 0 : index
    %c0_136 = arith.constant 0 : index
    %200 = vector.load %arg20[%c0_135, %c0_136] : memref<128x2xf32, #tpu.memory_space<vmem>>, vector<128x2xf32>
    %cst_137 = arith.constant dense<0.000000e+00> : vector<2x2xf32>
    %201 = tpu.matmul %199, %200, %cst_137 {dimension_numbers = #tpu.dot_dimension_numbers<[1], [0], [0], [1], [0, 0, 1, 1], [], []>} : vector<2x128xf32>, vector<128x2xf32>, vector<2x2xf32> -> vector<2x2xf32>
    %c0_138 = arith.constant 0 : index
    %c0_139 = arith.constant 0 : index
    %202 = vector.load %arg21[%c0_138, %c0_139] : memref<1x2xf32, #tpu.memory_space<vmem>>, vector<1x2xf32>
    %203 = vector.broadcast %202 : vector<1x2xf32> to vector<2x2xf32>
    %204 = arith.addf %201, %203 : vector<2x2xf32>
    %cst_140 = arith.constant 0.000000e+00 : f32
    %205 = vector.broadcast %cst_140 : f32 to vector<2x2xf32>
    %206 = arith.maximumf %204, %205 : vector<2x2xf32>
    %c0_141 = arith.constant 0 : index
    %c0_142 = arith.constant 0 : index
    %207 = vector.load %arg22[%c0_141, %c0_142] : memref<2x128xf32, #tpu.memory_space<vmem>>, vector<2x128xf32>
    %cst_143 = arith.constant dense<0.000000e+00> : vector<2x128xf32>
    %208 = tpu.matmul %206, %207, %cst_143 {dimension_numbers = #tpu.dot_dimension_numbers<[1], [0], [0], [1], [0, 0, 1, 1], [], []>} : vector<2x2xf32>, vector<2x128xf32>, vector<2x128xf32> -> vector<2x128xf32>
    %c0_144 = arith.constant 0 : index
    %c0_145 = arith.constant 0 : index
    %209 = vector.load %arg23[%c0_144, %c0_145] : memref<1x128xf32, #tpu.memory_space<vmem>>, vector<1x128xf32>
    %210 = vector.broadcast %209 : vector<1x128xf32> to vector<2x128xf32>
    %211 = arith.addf %208, %210 : vector<2x128xf32>
    %cst_146 = arith.constant 0.000000e+00 : f32
    %212 = vector.broadcast %cst_146 : f32 to vector<2x128xf32>
    %213 = arith.subf %212, %211 : vector<2x128xf32>
    %214 = math.exp %213 : vector<2x128xf32>
    %cst_147 = arith.constant 1.000000e+00 : f32
    %215 = vector.broadcast %cst_147 : f32 to vector<2x128xf32>
    %216 = arith.addf %215, %214 : vector<2x128xf32>
    %cst_148 = arith.constant 1.000000e+00 : f32
    %217 = vector.broadcast %cst_148 : f32 to vector<2x128xf32>
    %218 = arith.divf %217, %216 : vector<2x128xf32>
    %219 = vector.shape_cast %218 : vector<2x128xf32> to vector<2x1x128xf32>
    %220 = vector.shape_cast %219 : vector<2x1x128xf32> to vector<2x1x128xf32>
    %221 = vector.broadcast %220 : vector<2x1x128xf32> to vector<2x8x128xf32>
    %222 = vector.shape_cast %221 : vector<2x8x128xf32> to vector<16x128xf32>
    %223 = arith.mulf %197, %222 : vector<16x128xf32>
    %224 = arith.addf %223, %133 : vector<16x128xf32>
    %cst_149 = arith.constant 0.000000e+00 : f32
    %225 = vector.broadcast %cst_149 : f32 to vector<16x128xf32>
    %226 = arith.maximumf %224, %225 : vector<16x128xf32>
    %c0_150 = arith.constant 0 : index
    %c0_151 = arith.constant 0 : index
    %227 = vector.load %arg24[%c0_150, %c0_151] : memref<16x128xf32, #tpu.memory_space<vmem>>, vector<16x128xf32>
    tpu.vector_store %arg24[%c0_150, %c0_151], %226 {strides = array<i32>} : memref<16x128xf32, #tpu.memory_space<vmem>>, vector<16x128xf32>,
    return
  }
}

</mosaic_0001>

<llo_original>
// kernel: _lambda_.1
$region0: #{_lambda_.1}
  #allocation0 [shape = 'u32[]', space=smem, size = 0x4, offset = 0x4, fixed_abs, tag = 'smem constant byte address 0x4 - core index']
  #allocation1 [shape = 'u32[144,128]{1,0:T(1,128)}', space=vmem, size = 0x12000, scoped, tag = 'internal scratch']
  #allocation2 [shape = 'f32[18,128]{1,0:T(8,128)}', space=vmem, size = 0x3000, scoped, tag = 'scratch operand']
  %s0 = inlined_call_operand.vmem [shape: bf16[3,16,72], index: 0, kind: input, shape index: {}]
  %s1 = inlined_call_operand.vmem [shape: bf16[3,72,128], index: 1, kind: input, shape index: {}]
  %s2 = inlined_call_operand.vmem [shape: f32[1,128], index: 2, kind: input, shape index: {}]
  %s3 = inlined_call_operand.vmem [shape: f32[1,128], index: 3, kind: input, shape index: {}]
  %s4 = inlined_call_operand.vmem [shape: bf16[3,128,128], index: 4, kind: input, shape index: {}]
  %s5 = inlined_call_operand.vmem [shape: f32[1,128], index: 5, kind: input, shape index: {}]
  %s6 = inlined_call_operand.vmem [shape: f32[1,128], index: 6, kind: input, shape index: {}]
  %s7 = inlined_call_operand.vmem [shape: f32[128,2], index: 7, kind: input, shape index: {}]
  %s8 = inlined_call_operand.vmem [shape: f32[1,2], index: 8, kind: input, shape index: {}]
  %s9 = inlined_call_operand.vmem [shape: f32[2,128], index: 9, kind: input, shape index: {}]
  %s10 = inlined_call_operand.vmem [shape: f32[1,128], index: 10, kind: input, shape index: {}]
  %s11 = inlined_call_operand.vmem [shape: bf16[72,128], index: 11, kind: input, shape index: {}]
  %s12 = inlined_call_operand.vmem [shape: f32[1,128], index: 12, kind: input, shape index: {}]
  %s13 = inlined_call_operand.vmem [shape: f32[1,128], index: 13, kind: input, shape index: {}]
  %s14 = inlined_call_operand.vmem [shape: bf16[3,128,128], index: 14, kind: input, shape index: {}]
  %s15 = inlined_call_operand.vmem [shape: f32[1,128], index: 15, kind: input, shape index: {}]
  %s16 = inlined_call_operand.vmem [shape: f32[1,128], index: 16, kind: input, shape index: {}]
  %s17 = inlined_call_operand.vmem [shape: bf16[3,128,128], index: 17, kind: input, shape index: {}]
  %s18 = inlined_call_operand.vmem [shape: f32[1,128], index: 18, kind: input, shape index: {}]
  %s19 = inlined_call_operand.vmem [shape: f32[1,128], index: 19, kind: input, shape index: {}]
  %s20 = inlined_call_operand.vmem [shape: f32[128,2], index: 20, kind: input, shape index: {}]
  %s21 = inlined_call_operand.vmem [shape: f32[1,2], index: 21, kind: input, shape index: {}]
  %s22 = inlined_call_operand.vmem [shape: f32[2,128], index: 22, kind: input, shape index: {}]
  %s23 = inlined_call_operand.vmem [shape: f32[1,128], index: 23, kind: input, shape index: {}]
  %s24 = inlined_call_operand.vmem [shape: f32[16,128], index: 24, kind: output, shape index: {}]
  %s25 = sld [smem:[#allocation0]]
  $region106: #{_lambda_.1} parent=0
    _
  %s27 = ssub.s32 1, %s25
  %s28 = scalar_select 0, %s27, %s25
  // Predicated region
  $region2: #{_lambda_.1} parent=0 // pred_check
    _
  $region3: #{_lambda_.1} parent=0 // pred_check_branch
    %30 = sbr.rel (0) target = $region5
  $region4: #{_lambda_.1} parent=0 // pred_region
    _
  $region5: #{_lambda_.1} parent=0 // pred_fallthru
    _
  // Predicated region
  $region6: #{_lambda_.1} parent=0 // pred_check
    _
  $region7: #{_lambda_.1} parent=0 // pred_check_branch
    %32 = sbr.rel (0) target = $region9
  $region8: #{_lambda_.1} parent=0 // pred_region
    _
  $region9: #{_lambda_.1} parent=0 // pred_fallthru
    _
  // Predicated region
  $region10: #{_lambda_.1} parent=0 // pred_check
    _
  $region11: #{_lambda_.1} parent=0 // pred_check_branch
    %34 = sbr.rel (0) target = $region13
  $region12: #{_lambda_.1} parent=0 // pred_region
    _
  $region13: #{_lambda_.1} parent=0 // pred_fallthru
    _
  // Predicated region
  $region14: #{_lambda_.1} parent=0 // pred_check
    _
  $region15: #{_lambda_.1} parent=0 // pred_check_branch
    %36 = sbr.rel (0) target = $region17
  $region16: #{_lambda_.1} parent=0 // pred_region
    _
  $region17: #{_lambda_.1} parent=0 // pred_fallthru
    _
  // Predicated region
  $region18: #{_lambda_.1} parent=0 // pred_check
    _
  $region19: #{_lambda_.1} parent=0 // pred_check_branch
    %38 = sbr.rel (0) target = $region21
  $region20: #{_lambda_.1} parent=0 // pred_region
    _
  $region21: #{_lambda_.1} parent=0 // pred_fallthru
    _
  // Predicated region
  $region22: #{_lambda_.1} parent=0 // pred_check
    _
  $region23: #{_lambda_.1} parent=0 // pred_check_branch
    %40 = sbr.rel (0) target = $region25
  $region24: #{_lambda_.1} parent=0 // pred_region
    _
  $region25: #{_lambda_.1} parent=0 // pred_fallthru
    _
  // Predicated region
  $region26: #{_lambda_.1} parent=0 // pred_check
    _
  $region27: #{_lambda_.1} parent=0 // pred_check_branch
    %42 = sbr.rel (0) target = $region29
  $region28: #{_lambda_.1} parent=0 // pred_region
    _
  $region29: #{_lambda_.1} parent=0 // pred_fallthru
    _
  // Predicated region
  $region30: #{_lambda_.1} parent=0 // pred_check
    _
  $region31: #{_lambda_.1} parent=0 // pred_check_branch
    %44 = sbr.rel (0) target = $region33
  $region32: #{_lambda_.1} parent=0 // pred_region
    _
  $region33: #{_lambda_.1} parent=0 // pred_fallthru
    _
  // Predicated region
  $region34: #{_lambda_.1} parent=0 // pred_check
    _
  $region35: #{_lambda_.1} parent=0 // pred_check_branch
    %46 = sbr.rel (0) target = $region37
  $region36: #{_lambda_.1} parent=0 // pred_region
    _
  $region37: #{_lambda_.1} parent=0 // pred_fallthru
    _
  // Predicated region
  $region38: #{_lambda_.1} parent=0 // pred_check
    _
  $region39: #{_lambda_.1} parent=0 // pred_check_branch
    %48 = sbr.rel (0) target = $region41
  $region40: #{_lambda_.1} parent=0 // pred_region
    _
  $region41: #{_lambda_.1} parent=0 // pred_fallthru
    _
  // Predicated region
  $region42: #{_lambda_.1} parent=0 // pred_check
    _
  $region43: #{_lambda_.1} parent=0 // pred_check_branch
    %50 = sbr.rel (0) target = $region45
  $region44: #{_lambda_.1} parent=0 // pred_region
    _
  $region45: #{_lambda_.1} parent=0 // pred_fallthru
    _
  // Predicated region
  $region46: #{_lambda_.1} parent=0 // pred_check
    _
  $region47: #{_lambda_.1} parent=0 // pred_check_branch
    %52 = sbr.rel (0) target = $region49
  $region48: #{_lambda_.1} parent=0 // pred_region
    _
  $region49: #{_lambda_.1} parent=0 // pred_fallthru
    _
  // Predicated region
  $region50: #{_lambda_.1} parent=0 // pred_check
    _
  $region51: #{_lambda_.1} parent=0 // pred_check_branch
    %54 = sbr.rel (0) target = $region53
  $region52: #{_lambda_.1} parent=0 // pred_region
    _
  $region53: #{_lambda_.1} parent=0 // pred_fallthru
    _
  // Predicated region
  $region54: #{_lambda_.1} parent=0 // pred_check
    _
  $region55: #{_lambda_.1} parent=0 // pred_check_branch
    %56 = sbr.rel (0) target = $region57
  $region56: #{_lambda_.1} parent=0 // pred_region
    _
  $region57: #{_lambda_.1} parent=0 // pred_fallthru
    _
  // Predicated region
  $region58: #{_lambda_.1} parent=0 // pred_check
    _
  $region59: #{_lambda_.1} parent=0 // pred_check_branch
    %58 = sbr.rel (0) target = $region61
  $region60: #{_lambda_.1} parent=0 // pred_region
    _
  $region61: #{_lambda_.1} parent=0 // pred_fallthru
    _
  // Predicated region
  $region62: #{_lambda_.1} parent=0 // pred_check
    _
  $region63: #{_lambda_.1} parent=0 // pred_check_branch
    %60 = sbr.rel (0) target = $region65
  $region64: #{_lambda_.1} parent=0 // pred_region
    _
  $region65: #{_lambda_.1} parent=0 // pred_fallthru
    _
  // Predicated region
  $region66: #{_lambda_.1} parent=0 // pred_check
    _
  $region67: #{_lambda_.1} parent=0 // pred_check_branch
    %62 = sbr.rel (0) target = $region69
  $region68: #{_lambda_.1} parent=0 // pred_region
    _
  $region69: #{_lambda_.1} parent=0 // pred_fallthru
    _
  // Predicated region
  $region70: #{_lambda_.1} parent=0 // pred_check
    _
  $region71: #{_lambda_.1} parent=0 // pred_check_branch
    %64 = sbr.rel (0) target = $region73
  $region72: #{_lambda_.1} parent=0 // pred_region
    _
  $region73: #{_lambda_.1} parent=0 // pred_fallthru
    _
  // Predicated region
  $region74: #{_lambda_.1} parent=0 // pred_check
    _
  $region75: #{_lambda_.1} parent=0 // pred_check_branch
    %66 = sbr.rel (0) target = $region77
  $region76: #{_lambda_.1} parent=0 // pred_region
    _
  $region77: #{_lambda_.1} parent=0 // pred_fallthru
    _
  // Predicated region
  $region78: #{_lambda_.1} parent=0 // pred_check
    _
  $region79: #{_lambda_.1} parent=0 // pred_check_branch
    %68 = sbr.rel (0) target = $region81
  $region80: #{_lambda_.1} parent=0 // pred_region
    _
  $region81: #{_lambda_.1} parent=0 // pred_fallthru
    _
  // Predicated region
  $region82: #{_lambda_.1} parent=0 // pred_check
    _
  $region83: #{_lambda_.1} parent=0 // pred_check_branch
    %70 = sbr.rel (0) target = $region85
  $region84: #{_lambda_.1} parent=0 // pred_region
    _
  $region85: #{_lambda_.1} parent=0 // pred_fallthru
    _
  // Predicated region
  $region86: #{_lambda_.1} parent=0 // pred_check
    _
  $region87: #{_lambda_.1} parent=0 // pred_check_branch
    %72 = sbr.rel (0) target = $region89
  $region88: #{_lambda_.1} parent=0 // pred_region
    _
  $region89: #{_lambda_.1} parent=0 // pred_fallthru
    _
  // Predicated region
  $region90: #{_lambda_.1} parent=0 // pred_check
    _
  $region91: #{_lambda_.1} parent=0 // pred_check_branch
    %74 = sbr.rel (0) target = $region93
  $region92: #{_lambda_.1} parent=0 // pred_region
    _
  $region93: #{_lambda_.1} parent=0 // pred_fallthru
    _
  // Predicated region
  $region94: #{_lambda_.1} parent=0 // pred_check
    _
  $region95: #{_lambda_.1} parent=0 // pred_check_branch
    %76 = sbr.rel (0) target = $region97
  $region96: #{_lambda_.1} parent=0 // pred_region
    _
  $region97: #{_lambda_.1} parent=0 // pred_fallthru
    _
  %v78 = vlaneseq
  %v79 = vshrl.u32 %v78, 7
  %v80 = vadd.s32 %v79, 8
  %vm81 = vcmp.lt.s32.totalorder %v79, 0
  %v82 = vsub.s32 0, %v79
  %v83 = vsel %vm81, %v82, %v79
  %v84 = vshrl.u32 %v83, 3
  %v85 = vand.u32 %v83, 7
  %v86 = vsub.s32 0, %v85
  %v87 = vsel %vm81, %v86, %v85
  %vm88 = vcmp.lt.s32.totalorder %v80, 0
  %v89 = vsub.s32 0, %v80
  %v90 = vsel %vm88, %v89, %v80
  %v91 = vshrl.u32 %v90, 3
  %v92 = vand.u32 %v90, 7
  %v93 = vsub.s32 0, %v92
  %v94 = vsel %vm88, %v93, %v92
  %vm95 = vcmp.ne.s32.totalorder %v87, 0
  %vm96 = vcmp.ne.s32.totalorder %v94, 0
  %vm97 = vcmp.lt.s32.totalorder %v87, 0
  %vm98 = vcmp.lt.s32.totalorder %v94, 0
  %vm99 = vmand %vm97, %vm95
  %vm100 = vmand %vm98, %vm96
  %v101 = vadd.s32 %v87, 8
  %v102 = vadd.s32 %v94, 8
  %v103 = vsel %vm99, %v101, %v87
  %v104 = vsel %vm100, %v102, %v94
  %vm105 = vcmp.eq.s32.totalorder %v103, 0
  %vm106 = vcmp.eq.s32.totalorder %v104, 0
  %vm107 = vcmp.eq.s32.totalorder %v103, 7
  %vm108 = vcmp.eq.s32.totalorder %v104, 7
  %109 = vst [vmem:[#allocation2] sm:$0xff] 0.0
  %110 = vst [vmem:[#allocation2 + $0x8] sm:$0xff] 0.0
  %111 = vst [vmem:[#allocation2 + $0x10] sm:$0x3] 0.0
  %v112 = vld [vmem:[%s0] sm:$0xf]
  %v113 = vld [vmem:[%s0 + $0x4] sm:$0xf]
  %v114 = vld [vmem:[%s1] sm:$0xf]
  %v115 = vld [vmem:[%s1 + $0x4] sm:$0xf]
  %v116 = vld [vmem:[%s1 + $0x8] sm:$0xf]
  %v117 = vld [vmem:[%s1 + $0xc] sm:$0xf]
  %v118 = vld [vmem:[%s1 + $0x10] sm:$0xf]
  %v119 = vld [vmem:[%s1 + $0x14] sm:$0xf]
  %v120 = vld [vmem:[%s1 + $0x18] sm:$0xf]
  %v121 = vld [vmem:[%s1 + $0x1c] sm:$0xf]
  %v122 = vld [vmem:[%s1 + $0x20] sm:$0xf]
  %s123 = scalar_lea.vmem %s0, 8
  %v124 = vld [vmem:[%s123] sm:$0xf]
  %v125 = vld [vmem:[%s123 + $0x4] sm:$0xf]
  %s126 = scalar_lea.vmem %s1, 36
  %v127 = vld [vmem:[%s126] sm:$0xf]
  %v128 = vld [vmem:[%s126 + $0x4] sm:$0xf]
  %v129 = vld [vmem:[%s126 + $0x8] sm:$0xf]
  %v130 = vld [vmem:[%s126 + $0xc] sm:$0xf]
  %v131 = vld [vmem:[%s126 + $0x10] sm:$0xf]
  %v132 = vld [vmem:[%s126 + $0x14] sm:$0xf]
  %v133 = vld [vmem:[%s126 + $0x18] sm:$0xf]
  %v134 = vld [vmem:[%s126 + $0x1c] sm:$0xf]
  %v135 = vld [vmem:[%s126 + $0x20] sm:$0xf]
  %v138 = vunpack.c.l.b16 %v124
  %v139 = vunpack.c.l.b16 %v125
  %v140 = vpack.c.b16 %v139, %v138
  %v150 = vunpack.c.l.b16 %v127
  %v151 = vunpack.c.l.b16 %v128
  %v152 = vunpack.c.l.b16 %v129
  %v153 = vunpack.c.l.b16 %v130
  %v154 = vunpack.c.l.b16 %v131
  %v155 = vunpack.c.l.b16 %v132
  %v156 = vunpack.c.l.b16 %v133
  %v157 = vunpack.c.l.b16 %v134
  %v158 = vunpack.c.l.b16 %v135
  %v159 = vpack.c.b16 %v151, %v150
  %v160 = vpack.c.b16 %v153, %v152
  %v161 = vpack.c.b16 %v155, %v154
  %v162 = vpack.c.b16 %v157, %v156
  %v163 = vpack.c.b16 %v158, %v158
  %vm168 = vcmask 588800
  %v170 = vsel %vm168, %v140, 0
  %vm172 = vcmask 1043456
  %v174 = vsel %vm172, %v163, 0
  %176 = vmatprep.subr.bf16.mxu0 0
  %177 = vmatpush1.bf16.msra.mxu0 %v159
  %178 = vmatprep.subr.bf16.mxu0 0
  %179 = vmatpush1.bf16.msra.mxu0 %v160
  %180 = vmatprep.subr.bf16.mxu0 0
  %181 = vmatpush1.bf16.msra.mxu0 %v161
  %182 = vmatprep.subr.bf16.mxu0 0
  %183 = vmatpush1.bf16.msra.mxu0 %v162
  %184 = vmatprep.subr.bf16.mxu0 0
  %185 = vmatpush1.bf16.msra.mxu0 %v174
  %186 = vmatprep.subr.bf16.mxu0 0
  %187 = vmatpush1.bf16.msra.mxu0 0
  %188 = vmatprep.subr.bf16.mxu0 0
  %189 = vmatpush1.bf16.msra.mxu0 0
  %190 = vmatprep.subr.bf16.mxu0 0
  %191 = vmatpush1.bf16.msra.mxu0 0
  %192 = vmatprep.subr.bf16.mxu0 0
  %193 = vmatpush1.bf16.msra.mxu0 0
  %194 = vmatprep.subr.bf16.mxu0 0
  %195 = vmatpush1.bf16.msra.mxu0 0
  %196 = vmatprep.subr.bf16.mxu0 0
  %197 = vmatpush1.bf16.msra.mxu0 0
  %198 = vmatprep.subr.bf16.mxu0 0
  %199 = vmatpush1.bf16.msra.mxu0 0
  %200 = vmatprep.subr.bf16.mxu0 0
  %201 = vmatpush1.bf16.msra.mxu0 0
  %202 = vmatprep.subr.bf16.mxu0 0
  %203 = vmatpush1.bf16.msra.mxu0 0
  %204 = vmatprep.subr.bf16.mxu0 0
  %205 = vmatpush1.bf16.msra.mxu0 0
  %206 = vmatprep.subr.bf16.mxu0 0
  %207 = vmatpush1.bf16.msra.mxu0 0
  %208 = vmatprep.mubr.bf16.mxu0 0
  %209 = vmatmul.mubr.bf16.gmra.mrb[0].mxu0 %v170
  %v210 = vpop.f32.mrb[0].mxu0
  %v211 = vadd.f32 0.0, %v210
  %v212 = vpop.f32.mrb[0].mxu0
  %v213 = vpop.f32.mrb[0].mxu0
  %v214 = vadd.f32 0.0, %v213
  %v215 = vpop.f32.mrb[0].mxu0
  %216 = vdwg.mxu0
  %v219 = vunpack.c.l.b16 %v112
  %v220 = vunpack.c.l.b16 %v113
  %v221 = vpack.c.b16 %v220, %v219
  %v231 = vunpack.c.l.b16 %v114
  %v232 = vunpack.c.l.b16 %v115
  %v233 = vunpack.c.l.b16 %v116
  %v234 = vunpack.c.l.b16 %v117
  %v235 = vunpack.c.l.b16 %v118
  %v236 = vunpack.c.l.b16 %v119
  %v237 = vunpack.c.l.b16 %v120
  %v238 = vunpack.c.l.b16 %v121
  %v239 = vunpack.c.l.b16 %v122
  %v240 = vpack.c.b16 %v232, %v231
  %v241 = vpack.c.b16 %v234, %v233
  %v242 = vpack.c.b16 %v236, %v235
  %v243 = vpack.c.b16 %v238, %v237
  %v244 = vpack.c.b16 %v239, %v239
  %v250 = vsel %vm168, %v221, 0
  %v253 = vsel %vm172, %v244, 0
  %255 = vmatprep.subr.bf16.mxu0 0
  %256 = vmatpush1.bf16.msra.mxu0 %v240
  %257 = vmatprep.subr.bf16.mxu0 0
  %258 = vmatpush1.bf16.msra.mxu0 %v241
  %259 = vmatprep.subr.bf16.mxu0 0
  %260 = vmatpush1.bf16.msra.mxu0 %v242
  %261 = vmatprep.subr.bf16.mxu0 0
  %262 = vmatpush1.bf16.msra.mxu0 %v243
  %263 = vmatprep.subr.bf16.mxu0 0
  %264 = vmatpush1.bf16.msra.mxu0 %v253
  %265 = vmatprep.subr.bf16.mxu0 0
  %266 = vmatpush1.bf16.msra.mxu0 0
  %267 = vmatprep.subr.bf16.mxu0 0
  %268 = vmatpush1.bf16.msra.mxu0 0
  %269 = vmatprep.subr.bf16.mxu0 0
  %270 = vmatpush1.bf16.msra.mxu0 0
  %271 = vmatprep.subr.bf16.mxu0 0
  %272 = vmatpush1.bf16.msra.mxu0 0
  %273 = vmatprep.subr.bf16.mxu0 0
  %274 = vmatpush1.bf16.msra.mxu0 0
  %275 = vmatprep.subr.bf16.mxu0 0
  %276 = vmatpush1.bf16.msra.mxu0 0
  %277 = vmatprep.subr.bf16.mxu0 0
  %278 = vmatpush1.bf16.msra.mxu0 0
  %279 = vmatprep.subr.bf16.mxu0 0
  %280 = vmatpush1.bf16.msra.mxu0 0
  %281 = vmatprep.subr.bf16.mxu0 0
  %282 = vmatpush1.bf16.msra.mxu0 0
  %283 = vmatprep.subr.bf16.mxu0 0
  %284 = vmatpush1.bf16.msra.mxu0 0
  %285 = vmatprep.subr.bf16.mxu0 0
  %286 = vmatpush1.bf16.msra.mxu0 0
  %287 = vmatprep.mubr.bf16.mxu0 0
  %288 = vmatmul.mubr.bf16.gmra.mrb[0].mxu0 %v250
  %v289 = vpop.f32.mrb[0].mxu0
  %v290 = vadd.f32 %v211, %v289
  %v291 = vpop.f32.mrb[0].mxu0
  %v292 = vpop.f32.mrb[0].mxu0
  %v293 = vadd.f32 %v214, %v292
  %v294 = vpop.f32.mrb[0].mxu0
  %295 = vdwg.mxu0
  %s296 = scalar_lea.vmem %s0, 16
  %v297 = vld [vmem:[%s296] sm:$0xf]
  %v298 = vld [vmem:[%s296 + $0x4] sm:$0xf]
  %s299 = scalar_lea.vmem %s1, 72
  %v300 = vld [vmem:[%s299] sm:$0xf]
  %v301 = vld [vmem:[%s299 + $0x4] sm:$0xf]
  %v302 = vld [vmem:[%s299 + $0x8] sm:$0xf]
  %v303 = vld [vmem:[%s299 + $0xc] sm:$0xf]
  %v304 = vld [vmem:[%s299 + $0x10] sm:$0xf]
  %v305 = vld [vmem:[%s299 + $0x14] sm:$0xf]
  %v306 = vld [vmem:[%s299 + $0x18] sm:$0xf]
  %v307 = vld [vmem:[%s299 + $0x1c] sm:$0xf]
  %v308 = vld [vmem:[%s299 + $0x20] sm:$0xf]
  %v311 = vunpack.c.l.b16 %v297
  %v312 = vunpack.c.l.b16 %v298
  %v313 = vpack.c.b16 %v312, %v311
  %v323 = vunpack.c.l.b16 %v300
  %v324 = vunpack.c.l.b16 %v301
  %v325 = vunpack.c.l.b16 %v302
  %v326 = vunpack.c.l.b16 %v303
  %v327 = vunpack.c.l.b16 %v304
  %v328 = vunpack.c.l.b16 %v305
  %v329 = vunpack.c.l.b16 %v306
  %v330 = vunpack.c.l.b16 %v307
  %v331 = vunpack.c.l.b16 %v308
  %v332 = vpack.c.b16 %v324, %v323
  %v333 = vpack.c.b16 %v326, %v325
  %v334 = vpack.c.b16 %v328, %v327
  %v335 = vpack.c.b16 %v330, %v329
  %v336 = vpack.c.b16 %v331, %v331
  %v342 = vsel %vm168, %v313, 0
  %v345 = vsel %vm172, %v336, 0
  %347 = vmatprep.subr.bf16.mxu0 0
  %348 = vmatpush1.bf16.msra.mxu0 %v332
  %349 = vmatprep.subr.bf16.mxu0 0
  %350 = vmatpush1.bf16.msra.mxu0 %v333
  %351 = vmatprep.subr.bf16.mxu0 0
  %352 = vmatpush1.bf16.msra.mxu0 %v334
  %353 = vmatprep.subr.bf16.mxu0 0
  %354 = vmatpush1.bf16.msra.mxu0 %v335
  %355 = vmatprep.subr.bf16.mxu0 0
  %356 = vmatpush1.bf16.msra.mxu0 %v345
  %357 = vmatprep.subr.bf16.mxu0 0
  %358 = vmatpush1.bf16.msra.mxu0 0
  %359 = vmatprep.subr.bf16.mxu0 0
  %360 = vmatpush1.bf16.msra.mxu0 0
  %361 = vmatprep.subr.bf16.mxu0 0
  %362 = vmatpush1.bf16.msra.mxu0 0
  %363 = vmatprep.subr.bf16.mxu0 0
  %364 = vmatpush1.bf16.msra.mxu0 0
  %365 = vmatprep.subr.bf16.mxu0 0
  %366 = vmatpush1.bf16.msra.mxu0 0
  %367 = vmatprep.subr.bf16.mxu0 0
  %368 = vmatpush1.bf16.msra.mxu0 0
  %369 = vmatprep.subr.bf16.mxu0 0
  %370 = vmatpush1.bf16.msra.mxu0 0
  %371 = vmatprep.subr.bf16.mxu0 0
  %372 = vmatpush1.bf16.msra.mxu0 0
  %373 = vmatprep.subr.bf16.mxu0 0
  %374 = vmatpush1.bf16.msra.mxu0 0
  %375 = vmatprep.subr.bf16.mxu0 0
  %376 = vmatpush1.bf16.msra.mxu0 0
  %377 = vmatprep.subr.bf16.mxu0 0
  %378 = vmatpush1.bf16.msra.mxu0 0
  %379 = vmatprep.mubr.bf16.mxu0 0
  %380 = vmatmul.mubr.bf16.gmra.mrb[0].mxu0 %v342
  %v381 = vpop.f32.mrb[0].mxu0
  %v382 = vadd.f32 0.0, %v381
  %v383 = vpop.f32.mrb[0].mxu0
  %v384 = vpop.f32.mrb[0].mxu0
  %v385 = vadd.f32 0.0, %v384
  %v386 = vpop.f32.mrb[0].mxu0
  %387 = vdwg.mxu0
  %v388 = vadd.f32 %v290, %v382
  %v389 = vadd.f32 %v293, %v385
  %v390 = vmax.f32 %v388, 0.0
  %v391 = vmax.f32 %v389, 0.0
  %v392 = vld [vmem:[%s2] sm:$0x1]
  %v394 = vlaneseq
  %v395 = vshrl.u32 %v394, 7
  %v396 = vsub.s32 0, %v395
  %v397 = vrot.slane %v392, %v396
  %v399 = vmul.f32 %v390, %v397
  %v400 = vmul.f32 %v391, %v397
  %v401 = vld [vmem:[%s3] sm:$0x1]
  %v403 = vlaneseq
  %v404 = vshrl.u32 %v403, 7
  %v405 = vsub.s32 0, %v404
  %v406 = vrot.slane %v401, %v405
  %v408 = vadd.f32 %v399, %v406
  %v409 = vadd.f32 %v400, %v406
  %410 = vst [vmem:[#allocation2 + $0x1] sm:$0xff] %v408
  %411 = vst [vmem:[#allocation2 + $0x9] sm:$0xff] %v409
  %v412 = vld [vmem:[#allocation2] sm:$0xff]
  %v413 = vld [vmem:[#allocation2 + $0x8] sm:$0xff]
  %v414 = vld [vmem:[#allocation2 + $0x2] sm:$0xff]
  %v415 = vld [vmem:[#allocation2 + $0xa] sm:$0xff]
  %v416 = vsel %vm105, 1, 0
  %v417 = vsel %vm106, 1, 0
  %vm418 = vcmp.eq.s32.totalorder %v416, 1
  %vm419 = vcmp.eq.s32.totalorder %v417, 1
  %v420 = vsel %vm418, 0.0, %v412
  %v421 = vsel %vm419, 0.0, %v413
  %v422 = vpack.c.bf16 %v421, %v420
  %v423 = vsel %vm107, 1, 0
  %v424 = vsel %vm108, 1, 0
  %vm425 = vcmp.eq.s32.totalorder %v423, 1
  %vm426 = vcmp.eq.s32.totalorder %v424, 1
  %v427 = vsel %vm425, 0.0, %v414
  %v428 = vsel %vm426, 0.0, %v415
  %v429 = vpack.c.bf16 %v428, %v427
  %v430 = vld [vmem:[%s4] sm:$0xf]
  %v431 = vld [vmem:[%s4 + $0x4] sm:$0xf]
  %v432 = vld [vmem:[%s4 + $0x8] sm:$0xf]
  %v433 = vld [vmem:[%s4 + $0xc] sm:$0xf]
  %v434 = vld [vmem:[%s4 + $0x10] sm:$0xf]
  %v435 = vld [vmem:[%s4 + $0x14] sm:$0xf]
  %v436 = vld [vmem:[%s4 + $0x18] sm:$0xf]
  %v437 = vld [vmem:[%s4 + $0x1c] sm:$0xf]
  %v438 = vld [vmem:[%s4 + $0x20] sm:$0xf]
  %v439 = vld [vmem:[%s4 + $0x24] sm:$0xf]
  %v440 = vld [vmem:[%s4 + $0x28] sm:$0xf]
  %v441 = vld [vmem:[%s4 + $0x2c] sm:$0xf]
  %v442 = vld [vmem:[%s4 + $0x30] sm:$0xf]
  %v443 = vld [vmem:[%s4 + $0x34] sm:$0xf]
  %v444 = vld [vmem:[%s4 + $0x38] sm:$0xf]
  %v445 = vld [vmem:[%s4 + $0x3c] sm:$0xf]
  %v446 = vpack.c.bf16 %v409, %v408
  %s447 = scalar_lea.vmem %s4, 64
  %v448 = vld [vmem:[%s447] sm:$0xf]
  %v449 = vld [vmem:[%s447 + $0x4] sm:$0xf]
  %v450 = vld [vmem:[%s447 + $0x8] sm:$0xf]
  %v451 = vld [vmem:[%s447 + $0xc] sm:$0xf]
  %v452 = vld [vmem:[%s447 + $0x10] sm:$0xf]
  %v453 = vld [vmem:[%s447 + $0x14] sm:$0xf]
  %v454 = vld [vmem:[%s447 + $0x18] sm:$0xf]
  %v455 = vld [vmem:[%s447 + $0x1c] sm:$0xf]
  %v456 = vld [vmem:[%s447 + $0x20] sm:$0xf]
  %v457 = vld [vmem:[%s447 + $0x24] sm:$0xf]
  %v458 = vld [vmem:[%s447 + $0x28] sm:$0xf]
  %v459 = vld [vmem:[%s447 + $0x2c] sm:$0xf]
  %v460 = vld [vmem:[%s447 + $0x30] sm:$0xf]
  %v461 = vld [vmem:[%s447 + $0x34] sm:$0xf]
  %v462 = vld [vmem:[%s447 + $0x38] sm:$0xf]
  %v463 = vld [vmem:[%s447 + $0x3c] sm:$0xf]
  %v480 = vunpack.c.l.b16 %v448
  %v481 = vunpack.c.l.b16 %v449
  %v482 = vunpack.c.l.b16 %v450
  %v483 = vunpack.c.l.b16 %v451
  %v484 = vunpack.c.l.b16 %v452
  %v485 = vunpack.c.l.b16 %v453
  %v486 = vunpack.c.l.b16 %v454
  %v487 = vunpack.c.l.b16 %v455
  %v488 = vunpack.c.l.b16 %v456
  %v489 = vunpack.c.l.b16 %v457
  %v490 = vunpack.c.l.b16 %v458
  %v491 = vunpack.c.l.b16 %v459
  %v492 = vunpack.c.l.b16 %v460
  %v493 = vunpack.c.l.b16 %v461
  %v494 = vunpack.c.l.b16 %v462
  %v495 = vunpack.c.l.b16 %v463
  %v496 = vpack.c.b16 %v481, %v480
  %v497 = vpack.c.b16 %v483, %v482
  %v498 = vpack.c.b16 %v485, %v484
  %v499 = vpack.c.b16 %v487, %v486
  %v500 = vpack.c.b16 %v489, %v488
  %v501 = vpack.c.b16 %v491, %v490
  %v502 = vpack.c.b16 %v493, %v492
  %v503 = vpack.c.b16 %v495, %v494
  %512 = vmatprep.subr.bf16.mxu0 0
  %513 = vmatpush1.bf16.msra.mxu0 %v496
  %514 = vmatprep.subr.bf16.mxu0 0
  %515 = vmatpush1.bf16.msra.mxu0 %v497
  %516 = vmatprep.subr.bf16.mxu0 0
  %517 = vmatpush1.bf16.msra.mxu0 %v498
  %518 = vmatprep.subr.bf16.mxu0 0
  %519 = vmatpush1.bf16.msra.mxu0 %v499
  %520 = vmatprep.subr.bf16.mxu0 0
  %521 = vmatpush1.bf16.msra.mxu0 %v500
  %522 = vmatprep.subr.bf16.mxu0 0
  %523 = vmatpush1.bf16.msra.mxu0 %v501
  %524 = vmatprep.subr.bf16.mxu0 0
  %525 = vmatpush1.bf16.msra.mxu0 %v502
  %526 = vmatprep.subr.bf16.mxu0 0
  %527 = vmatpush1.bf16.msra.mxu0 %v503
  %528 = vmatprep.subr.bf16.mxu0 0
  %529 = vmatpush1.bf16.msra.mxu0 0
  %530 = vmatprep.subr.bf16.mxu0 0
  %531 = vmatpush1.bf16.msra.mxu0 0
  %532 = vmatprep.subr.bf16.mxu0 0
  %533 = vmatpush1.bf16.msra.mxu0 0
  %534 = vmatprep.subr.bf16.mxu0 0
  %535 = vmatpush1.bf16.msra.mxu0 0
  %536 = vmatprep.subr.bf16.mxu0 0
  %537 = vmatpush1.bf16.msra.mxu0 0
  %538 = vmatprep.subr.bf16.mxu0 0
  %539 = vmatpush1.bf16.msra.mxu0 0
  %540 = vmatprep.subr.bf16.mxu0 0
  %541 = vmatpush1.bf16.msra.mxu0 0
  %542 = vmatprep.subr.bf16.mxu0 0
  %543 = vmatpush1.bf16.msra.mxu0 0
  %544 = vmatprep.mubr.bf16.mxu0 0
  %545 = vmatmul.mubr.bf16.gmra.mrb[0].mxu0 %v446
  %v546 = vpop.f32.mrb[0].mxu0
  %v547 = vadd.f32 0.0, %v546
  %v548 = vpop.f32.mrb[0].mxu0
  %v549 = vpop.f32.mrb[0].mxu0
  %v550 = vadd.f32 0.0, %v549
  %v551 = vpop.f32.mrb[0].mxu0
  %552 = vdwg.mxu0
  %v569 = vunpack.c.l.b16 %v430
  %v570 = vunpack.c.l.b16 %v431
  %v571 = vunpack.c.l.b16 %v432
  %v572 = vunpack.c.l.b16 %v433
  %v573 = vunpack.c.l.b16 %v434
  %v574 = vunpack.c.l.b16 %v435
  %v575 = vunpack.c.l.b16 %v436
  %v576 = vunpack.c.l.b16 %v437
  %v577 = vunpack.c.l.b16 %v438
  %v578 = vunpack.c.l.b16 %v439
  %v579 = vunpack.c.l.b16 %v440
  %v580 = vunpack.c.l.b16 %v441
  %v581 = vunpack.c.l.b16 %v442
  %v582 = vunpack.c.l.b16 %v443
  %v583 = vunpack.c.l.b16 %v444
  %v584 = vunpack.c.l.b16 %v445
  %v585 = vpack.c.b16 %v570, %v569
  %v586 = vpack.c.b16 %v572, %v571
  %v587 = vpack.c.b16 %v574, %v573
  %v588 = vpack.c.b16 %v576, %v575
  %v589 = vpack.c.b16 %v578, %v577
  %v590 = vpack.c.b16 %v580, %v579
  %v591 = vpack.c.b16 %v582, %v581
  %v592 = vpack.c.b16 %v584, %v583
  %601 = vmatprep.subr.bf16.mxu0 0
  %602 = vmatpush1.bf16.msra.mxu0 %v585
  %603 = vmatprep.subr.bf16.mxu0 0
  %604 = vmatpush1.bf16.msra.mxu0 %v586
  %605 = vmatprep.subr.bf16.mxu0 0
  %606 = vmatpush1.bf16.msra.mxu0 %v587
  %607 = vmatprep.subr.bf16.mxu0 0
  %608 = vmatpush1.bf16.msra.mxu0 %v588
  %609 = vmatprep.subr.bf16.mxu0 0
  %610 = vmatpush1.bf16.msra.mxu0 %v589
  %611 = vmatprep.subr.bf16.mxu0 0
  %612 = vmatpush1.bf16.msra.mxu0 %v590
  %613 = vmatprep.subr.bf16.mxu0 0
  %614 = vmatpush1.bf16.msra.mxu0 %v591
  %615 = vmatprep.subr.bf16.mxu0 0
  %616 = vmatpush1.bf16.msra.mxu0 %v592
  %617 = vmatprep.subr.bf16.mxu0 0
  %618 = vmatpush1.bf16.msra.mxu0 0
  %619 = vmatprep.subr.bf16.mxu0 0
  %620 = vmatpush1.bf16.msra.mxu0 0
  %621 = vmatprep.subr.bf16.mxu0 0
  %622 = vmatpush1.bf16.msra.mxu0 0
  %623 = vmatprep.subr.bf16.mxu0 0
  %624 = vmatpush1.bf16.msra.mxu0 0
  %625 = vmatprep.subr.bf16.mxu0 0
  %626 = vmatpush1.bf16.msra.mxu0 0
  %627 = vmatprep.subr.bf16.mxu0 0
  %628 = vmatpush1.bf16.msra.mxu0 0
  %629 = vmatprep.subr.bf16.mxu0 0
  %630 = vmatpush1.bf16.msra.mxu0 0
  %631 = vmatprep.subr.bf16.mxu0 0
  %632 = vmatpush1.bf16.msra.mxu0 0
  %633 = vmatprep.mubr.bf16.mxu0 0
  %634 = vmatmul.mubr.bf16.gmra.mrb[0].mxu0 %v422
  %v635 = vpop.f32.mrb[0].mxu0
  %v636 = vadd.f32 %v547, %v635
  %v637 = vpop.f32.mrb[0].mxu0
  %v638 = vpop.f32.mrb[0].mxu0
  %v639 = vadd.f32 %v550, %v638
  %v640 = vpop.f32.mrb[0].mxu0
  %641 = vdwg.mxu0
  %s642 = scalar_lea.vmem %s4, 128
  %v643 = vld [vmem:[%s642] sm:$0xf]
  %v644 = vld [vmem:[%s642 + $0x4] sm:$0xf]
  %v645 = vld [vmem:[%s642 + $0x8] sm:$0xf]
  %v646 = vld [vmem:[%s642 + $0xc] sm:$0xf]
  %v647 = vld [vmem:[%s642 + $0x10] sm:$0xf]
  %v648 = vld [vmem:[%s642 + $0x14] sm:$0xf]
  %v649 = vld [vmem:[%s642 + $0x18] sm:$0xf]
  %v650 = vld [vmem:[%s642 + $0x1c] sm:$0xf]
  %v651 = vld [vmem:[%s642 + $0x20] sm:$0xf]
  %v652 = vld [vmem:[%s642 + $0x24] sm:$0xf]
  %v653 = vld [vmem:[%s642 + $0x28] sm:$0xf]
  %v654 = vld [vmem:[%s642 + $0x2c] sm:$0xf]
  %v655 = vld [vmem:[%s642 + $0x30] sm:$0xf]
  %v656 = vld [vmem:[%s642 + $0x34] sm:$0xf]
  %v657 = vld [vmem:[%s642 + $0x38] sm:$0xf]
  %v658 = vld [vmem:[%s642 + $0x3c] sm:$0xf]
  %v675 = vunpack.c.l.b16 %v643
  %v676 = vunpack.c.l.b16 %v644
  %v677 = vunpack.c.l.b16 %v645
  %v678 = vunpack.c.l.b16 %v646
  %v679 = vunpack.c.l.b16 %v647
  %v680 = vunpack.c.l.b16 %v648
  %v681 = vunpack.c.l.b16 %v649
  %v682 = vunpack.c.l.b16 %v650
  %v683 = vunpack.c.l.b16 %v651
  %v684 = vunpack.c.l.b16 %v652
  %v685 = vunpack.c.l.b16 %v653
  %v686 = vunpack.c.l.b16 %v654
  %v687 = vunpack.c.l.b16 %v655
  %v688 = vunpack.c.l.b16 %v656
  %v689 = vunpack.c.l.b16 %v657
  %v690 = vunpack.c.l.b16 %v658
  %v691 = vpack.c.b16 %v676, %v675
  %v692 = vpack.c.b16 %v678, %v677
  %v693 = vpack.c.b16 %v680, %v679
  %v694 = vpack.c.b16 %v682, %v681
  %v695 = vpack.c.b16 %v684, %v683
  %v696 = vpack.c.b16 %v686, %v685
  %v697 = vpack.c.b16 %v688, %v687
  %v698 = vpack.c.b16 %v690, %v689
  %707 = vmatprep.subr.bf16.mxu0 0
  %708 = vmatpush1.bf16.msra.mxu0 %v691
  %709 = vmatprep.subr.bf16.mxu0 0
  %710 = vmatpush1.bf16.msra.mxu0 %v692
  %711 = vmatprep.subr.bf16.mxu0 0
  %712 = vmatpush1.bf16.msra.mxu0 %v693
  %713 = vmatprep.subr.bf16.mxu0 0
  %714 = vmatpush1.bf16.msra.mxu0 %v694
  %715 = vmatprep.subr.bf16.mxu0 0
  %716 = vmatpush1.bf16.msra.mxu0 %v695
  %717 = vmatprep.subr.bf16.mxu0 0
  %718 = vmatpush1.bf16.msra.mxu0 %v696
  %719 = vmatprep.subr.bf16.mxu0 0
  %720 = vmatpush1.bf16.msra.mxu0 %v697
  %721 = vmatprep.subr.bf16.mxu0 0
  %722 = vmatpush1.bf16.msra.mxu0 %v698
  %723 = vmatprep.subr.bf16.mxu0 0
  %724 = vmatpush1.bf16.msra.mxu0 0
  %725 = vmatprep.subr.bf16.mxu0 0
  %726 = vmatpush1.bf16.msra.mxu0 0
  %727 = vmatprep.subr.bf16.mxu0 0
  %728 = vmatpush1.bf16.msra.mxu0 0
  %729 = vmatprep.subr.bf16.mxu0 0
  %730 = vmatpush1.bf16.msra.mxu0 0
  %731 = vmatprep.subr.bf16.mxu0 0
  %732 = vmatpush1.bf16.msra.mxu0 0
  %733 = vmatprep.subr.bf16.mxu0 0
  %734 = vmatpush1.bf16.msra.mxu0 0
  %735 = vmatprep.subr.bf16.mxu0 0
  %736 = vmatpush1.bf16.msra.mxu0 0
  %737 = vmatprep.subr.bf16.mxu0 0
  %738 = vmatpush1.bf16.msra.mxu0 0
  %739 = vmatprep.mubr.bf16.mxu0 0
  %740 = vmatmul.mubr.bf16.gmra.mrb[0].mxu0 %v429
  %v741 = vpop.f32.mrb[0].mxu0
  %v742 = vadd.f32 0.0, %v741
  %v743 = vpop.f32.mrb[0].mxu0
  %v744 = vpop.f32.mrb[0].mxu0
  %v745 = vadd.f32 0.0, %v744
  %v746 = vpop.f32.mrb[0].mxu0
  %747 = vdwg.mxu0
  %v748 = vadd.f32 %v636, %v742
  %v749 = vadd.f32 %v639, %v745
  %v750 = vld [vmem:[%s5] sm:$0x1]
  %v752 = vlaneseq
  %v753 = vshrl.u32 %v752, 7
  %v754 = vsub.s32 0, %v753
  %v755 = vrot.slane %v750, %v754
  %v757 = vmul.f32 %v748, %v755
  %v758 = vmul.f32 %v749, %v755
  %v759 = vld [vmem:[%s6] sm:$0x1]
  %v761 = vlaneseq
  %v762 = vshrl.u32 %v761, 7
  %v763 = vsub.s32 0, %v762
  %v764 = vrot.slane %v759, %v763
  %v766 = vadd.f32 %v757, %v764
  %v767 = vadd.f32 %v758, %v764
  %v768 = vrot.slane %v766, 4
  %v769 = vadd.f32 %v766, %v768
  %v770 = vrot.slane %v769, 2
  %v771 = vadd.f32 %v769, %v770
  %v772 = vrot.slane %v771, 1
  %v773 = vadd.f32 %v771, %v772
  %v774 = vrot.slane %v767, 4
  %v775 = vadd.f32 %v767, %v774
  %v776 = vrot.slane %v775, 2
  %v777 = vadd.f32 %v775, %v776
  %v778 = vrot.slane %v777, 1
  %v779 = vadd.f32 %v777, %v778
  %v780 = vld [vmem:[%s7] sm:$0xff]
  %v781 = vld [vmem:[%s7 + $0x8] sm:$0xff]
  %v782 = vld [vmem:[%s7 + $0x10] sm:$0xff]
  %v783 = vld [vmem:[%s7 + $0x18] sm:$0xff]
  %v784 = vld [vmem:[%s7 + $0x20] sm:$0xff]
  %v785 = vld [vmem:[%s7 + $0x28] sm:$0xff]
  %v786 = vld [vmem:[%s7 + $0x30] sm:$0xff]
  %v787 = vld [vmem:[%s7 + $0x38] sm:$0xff]
  %v788 = vld [vmem:[%s7 + $0x40] sm:$0xff]
  %v789 = vld [vmem:[%s7 + $0x48] sm:$0xff]
  %v790 = vld [vmem:[%s7 + $0x50] sm:$0xff]
  %v791 = vld [vmem:[%s7 + $0x58] sm:$0xff]
  %v792 = vld [vmem:[%s7 + $0x60] sm:$0xff]
  %v793 = vld [vmem:[%s7 + $0x68] sm:$0xff]
  %v794 = vld [vmem:[%s7 + $0x70] sm:$0xff]
  %v795 = vld [vmem:[%s7 + $0x78] sm:$0xff]
  %v796 = vld [vmem:[%s8] sm:$0x1]
  %v798 = vlaneseq
  %v799 = vshrl.u32 %v798, 7
  %v800 = vsub.s32 0, %v799
  %v801 = vrot.slane %v796, %v800
  %vm805 = vcmask 1041409
  %v806 = vsel %vm805, %v779, %v773
  %808 = vmatprep.subr.mxu0 0.0
  %809 = vmatpush1.msra.mxu0 %v780
  %810 = vmatprep.subr.mxu0 0.0
  %811 = vmatpush1.msra.mxu0 %v781
  %812 = vmatprep.subr.mxu0 0.0
  %813 = vmatpush1.msra.mxu0 %v782
  %814 = vmatprep.subr.mxu0 0.0
  %815 = vmatpush1.msra.mxu0 %v783
  %816 = vmatprep.subr.mxu0 0.0
  %817 = vmatpush1.msra.mxu0 %v784
  %818 = vmatprep.subr.mxu0 0.0
  %819 = vmatpush1.msra.mxu0 %v785
  %820 = vmatprep.subr.mxu0 0.0
  %821 = vmatpush1.msra.mxu0 %v786
  %822 = vmatprep.subr.mxu0 0.0
  %823 = vmatpush1.msra.mxu0 %v787
  %824 = vmatprep.subr.mxu0 0.0
  %825 = vmatpush1.msra.mxu0 %v788
  %826 = vmatprep.subr.mxu0 0.0
  %827 = vmatpush1.msra.mxu0 %v789
  %828 = vmatprep.subr.mxu0 0.0
  %829 = vmatpush1.msra.mxu0 %v790
  %830 = vmatprep.subr.mxu0 0.0
  %831 = vmatpush1.msra.mxu0 %v791
  %832 = vmatprep.subr.mxu0 0.0
  %833 = vmatpush1.msra.mxu0 %v792
  %834 = vmatprep.subr.mxu0 0.0
  %835 = vmatpush1.msra.mxu0 %v793
  %836 = vmatprep.subr.mxu0 0.0
  %837 = vmatpush1.msra.mxu0 %v794
  %838 = vmatprep.subr.mxu0 0.0
  %839 = vmatpush1.msra.mxu0 %v795
  %840 = vmatprep.subr.mxu0 0.0
  %841 = vmatpush1.msra.mxu0 0.0
  %842 = vmatprep.subr.mxu0 0.0
  %843 = vmatpush1.msra.mxu0 0.0
  %844 = vmatprep.subr.mxu0 0.0
  %845 = vmatpush1.msra.mxu0 0.0
  %846 = vmatprep.subr.mxu0 0.0
  %847 = vmatpush1.msra.mxu0 0.0
  %848 = vmatprep.subr.mxu0 0.0
  %849 = vmatpush1.msra.mxu0 0.0
  %850 = vmatprep.subr.mxu0 0.0
  %851 = vmatpush1.msra.mxu0 0.0
  %852 = vmatprep.subr.mxu0 0.0
  %853 = vmatpush1.msra.mxu0 0.0
  %854 = vmatprep.subr.mxu0 0.0
  %855 = vmatpush1.msra.mxu0 0.0
  %856 = vmatprep.subr.mxu0 0.0
  %857 = vmatpush1.msra.mxu0 0.0
  %858 = vmatprep.subr.mxu0 0.0
  %859 = vmatpush1.msra.mxu0 0.0
  %860 = vmatprep.subr.mxu0 0.0
  %861 = vmatpush1.msra.mxu0 0.0
  %862 = vmatprep.subr.mxu0 0.0
  %863 = vmatpush1.msra.mxu0 0.0
  %864 = vmatprep.subr.mxu0 0.0
  %865 = vmatpush1.msra.mxu0 0.0
  %866 = vmatprep.subr.mxu0 0.0
  %867 = vmatpush1.msra.mxu0 0.0
  %868 = vmatprep.subr.mxu0 0.0
  %869 = vmatpush1.msra.mxu0 0.0
  %870 = vmatprep.subr.mxu0 0.0
  %871 = vmatpush1.msra.mxu0 0.0
  %872 = vmatprep.mubr.f32.mxu0 0.0
  %873 = vmatmul.mubr.f32.gmra.mrb[0].mxu0 %v806
  %v874 = vpop.f32.mrb[0].mxu0
  %v875 = vadd.f32 %v801, %v874
  %v876 = vpop.f32.mrb[0].mxu0
  %877 = vdwg.mxu0
  %v878 = vmax.f32 %v875, 0.0
  %v879 = vld [vmem:[%s9] sm:$0x3]
  %v880 = vld [vmem:[%s10] sm:$0x1]
  %v882 = vlaneseq
  %v883 = vshrl.u32 %v882, 7
  %v884 = vsub.s32 0, %v883
  %v885 = vrot.slane %v880, %v884
  %vm887 = vcmask 15360
  %v889 = vsel %vm887, %v878, 0
  %vm891 = vcmask 1041408
  %v893 = vsel %vm891, %v879, 0
  %895 = vmatprep.subr.mxu0 0.0
  %896 = vmatpush1.msra.mxu0 %v893
  %897 = vmatprep.subr.mxu0 0.0
  %898 = vmatpush1.msra.mxu0 0.0
  %899 = vmatprep.subr.mxu0 0.0
  %900 = vmatpush1.msra.mxu0 0.0
  %901 = vmatprep.subr.mxu0 0.0
  %902 = vmatpush1.msra.mxu0 0.0
  %903 = vmatprep.subr.mxu0 0.0
  %904 = vmatpush1.msra.mxu0 0.0
  %905 = vmatprep.subr.mxu0 0.0
  %906 = vmatpush1.msra.mxu0 0.0
  %907 = vmatprep.subr.mxu0 0.0
  %908 = vmatpush1.msra.mxu0 0.0
  %909 = vmatprep.subr.mxu0 0.0
  %910 = vmatpush1.msra.mxu0 0.0
  %911 = vmatprep.subr.mxu0 0.0
  %912 = vmatpush1.msra.mxu0 0.0
  %913 = vmatprep.subr.mxu0 0.0
  %914 = vmatpush1.msra.mxu0 0.0
  %915 = vmatprep.subr.mxu0 0.0
  %916 = vmatpush1.msra.mxu0 0.0
  %917 = vmatprep.subr.mxu0 0.0
  %918 = vmatpush1.msra.mxu0 0.0
  %919 = vmatprep.subr.mxu0 0.0
  %920 = vmatpush1.msra.mxu0 0.0
  %921 = vmatprep.subr.mxu0 0.0
  %922 = vmatpush1.msra.mxu0 0.0
  %923 = vmatprep.subr.mxu0 0.0
  %924 = vmatpush1.msra.mxu0 0.0
  %925 = vmatprep.subr.mxu0 0.0
  %926 = vmatpush1.msra.mxu0 0.0
  %927 = vmatprep.subr.mxu0 0.0
  %928 = vmatpush1.msra.mxu0 0.0
  %929 = vmatprep.subr.mxu0 0.0
  %930 = vmatpush1.msra.mxu0 0.0
  %931 = vmatprep.subr.mxu0 0.0
  %932 = vmatpush1.msra.mxu0 0.0
  %933 = vmatprep.subr.mxu0 0.0
  %934 = vmatpush1.msra.mxu0 0.0
  %935 = vmatprep.subr.mxu0 0.0
  %936 = vmatpush1.msra.mxu0 0.0
  %937 = vmatprep.subr.mxu0 0.0
  %938 = vmatpush1.msra.mxu0 0.0
  %939 = vmatprep.subr.mxu0 0.0
  %940 = vmatpush1.msra.mxu0 0.0
  %941 = vmatprep.subr.mxu0 0.0
  %942 = vmatpush1.msra.mxu0 0.0
  %943 = vmatprep.subr.mxu0 0.0
  %944 = vmatpush1.msra.mxu0 0.0
  %945 = vmatprep.subr.mxu0 0.0
  %946 = vmatpush1.msra.mxu0 0.0
  %947 = vmatprep.subr.mxu0 0.0
  %948 = vmatpush1.msra.mxu0 0.0
  %949 = vmatprep.subr.mxu0 0.0
  %950 = vmatpush1.msra.mxu0 0.0
  %951 = vmatprep.subr.mxu0 0.0
  %952 = vmatpush1.msra.mxu0 0.0
  %953 = vmatprep.subr.mxu0 0.0
  %954 = vmatpush1.msra.mxu0 0.0
  %955 = vmatprep.subr.mxu0 0.0
  %956 = vmatpush1.msra.mxu0 0.0
  %957 = vmatprep.subr.mxu0 0.0
  %958 = vmatpush1.msra.mxu0 0.0
  %959 = vmatprep.mubr.f32.mxu0 0.0
  %960 = vmatmul.mubr.f32.gmra.mrb[0].mxu0 %v889
  %v961 = vpop.f32.mrb[0].mxu0
  %v962 = vadd.f32 %v885, %v961
  %v963 = vpop.f32.mrb[0].mxu0
  %964 = vdwg.mxu0
  %v965 = vsub.f32 0.0, %v962
  %v966 = vmul.f32 %v965, 1.442695
  %v967 = vpow.pop %v966
  %v968 = vadd.f32 %v967, 1.0
  %v969 = vrcp.pop %v968
  %v970 = vmul.f32 1.0, %v969
  %v973 = vunpack.c.l.s4 1966171168
  %v974 = vunpack.c.0.s8 %v973
  %v975 = vlaneseq
  %v976 = vshrl.u32 %v975, 7
  %v977 = vsub.s32 %v974, %v976
  %v978 = vrot.slane %v970, %v977
  %v979 = vcombine.high %v978, %v978
  %v981 = vunpack.c.l.s4 1966171168
  %v982 = vunpack.c.0.s8 %v981
  %v983 = vlaneseq
  %v984 = vshrl.u32 %v983, 7
  %v985 = vsub.s32 %v982, %v984
  %v986 = vrot.slane %v978, %v985
  %v988 = vunpack.c.l.s4 1966171168
  %v989 = vunpack.c.0.s8 %v988
  %v990 = vlaneseq
  %v991 = vshrl.u32 %v990, 7
  %v992 = vsub.s32 %v989, %v991
  %v993 = vrot.slane %v979, %v992
  %v994 = vlaneseq
  %v995 = vshrl.u32 %v994, 7
  %v996 = vsub.s32 0, %v995
  %v997 = vrot.slane %v986, %v996
  %v998 = vlaneseq
  %v999 = vshrl.u32 %v998, 7
  %v1000 = vsub.s32 0, %v999
  %v1001 = vrot.slane %v993, %v1000
  %v1004 = vmul.f32 %v766, %v997
  %v1005 = vmul.f32 %v767, %v1001
  %v1006 = vld [vmem:[%s123] sm:$0xf]
  %v1007 = vld [vmem:[%s123 + $0x4] sm:$0xf]
  %v1008 = vld [vmem:[%s11] sm:$0xf]
  %v1009 = vld [vmem:[%s11 + $0x4] sm:$0xf]
  %v1010 = vld [vmem:[%s11 + $0x8] sm:$0xf]
  %v1011 = vld [vmem:[%s11 + $0xc] sm:$0xf]
  %v1012 = vld [vmem:[%s11 + $0x10] sm:$0xf]
  %v1013 = vld [vmem:[%s11 + $0x14] sm:$0xf]
  %v1014 = vld [vmem:[%s11 + $0x18] sm:$0xf]
  %v1015 = vld [vmem:[%s11 + $0x1c] sm:$0xf]
  %v1016 = vld [vmem:[%s11 + $0x20] sm:$0xf]
  %v1019 = vunpack.c.l.b16 %v1006
  %v1020 = vunpack.c.l.b16 %v1007
  %v1021 = vpack.c.b16 %v1020, %v1019
  %v1031 = vunpack.c.l.b16 %v1008
  %v1032 = vunpack.c.l.b16 %v1009
  %v1033 = vunpack.c.l.b16 %v1010
  %v1034 = vunpack.c.l.b16 %v1011
  %v1035 = vunpack.c.l.b16 %v1012
  %v1036 = vunpack.c.l.b16 %v1013
  %v1037 = vunpack.c.l.b16 %v1014
  %v1038 = vunpack.c.l.b16 %v1015
  %v1039 = vunpack.c.l.b16 %v1016
  %v1040 = vpack.c.b16 %v1032, %v1031
  %v1041 = vpack.c.b16 %v1034, %v1033
  %v1042 = vpack.c.b16 %v1036, %v1035
  %v1043 = vpack.c.b16 %v1038, %v1037
  %v1044 = vpack.c.b16 %v1039, %v1039
  %v1050 = vsel %vm168, %v1021, 0
  %v1053 = vsel %vm172, %v1044, 0
  %1055 = vmatprep.subr.bf16.mxu0 0
  %1056 = vmatpush1.bf16.msra.mxu0 %v1040
  %1057 = vmatprep.subr.bf16.mxu0 0
  %1058 = vmatpush1.bf16.msra.mxu0 %v1041
  %1059 = vmatprep.subr.bf16.mxu0 0
  %1060 = vmatpush1.bf16.msra.mxu0 %v1042
  %1061 = vmatprep.subr.bf16.mxu0 0
  %1062 = vmatpush1.bf16.msra.mxu0 %v1043
  %1063 = vmatprep.subr.bf16.mxu0 0
  %1064 = vmatpush1.bf16.msra.mxu0 %v1053
  %1065 = vmatprep.subr.bf16.mxu0 0
  %1066 = vmatpush1.bf16.msra.mxu0 0
  %1067 = vmatprep.subr.bf16.mxu0 0
  %1068 = vmatpush1.bf16.msra.mxu0 0
  %1069 = vmatprep.subr.bf16.mxu0 0
  %1070 = vmatpush1.bf16.msra.mxu0 0
  %1071 = vmatprep.subr.bf16.mxu0 0
  %1072 = vmatpush1.bf16.msra.mxu0 0
  %1073 = vmatprep.subr.bf16.mxu0 0
  %1074 = vmatpush1.bf16.msra.mxu0 0
  %1075 = vmatprep.subr.bf16.mxu0 0
  %1076 = vmatpush1.bf16.msra.mxu0 0
  %1077 = vmatprep.subr.bf16.mxu0 0
  %1078 = vmatpush1.bf16.msra.mxu0 0
  %1079 = vmatprep.subr.bf16.mxu0 0
  %1080 = vmatpush1.bf16.msra.mxu0 0
  %1081 = vmatprep.subr.bf16.mxu0 0
  %1082 = vmatpush1.bf16.msra.mxu0 0
  %1083 = vmatprep.subr.bf16.mxu0 0
  %1084 = vmatpush1.bf16.msra.mxu0 0
  %1085 = vmatprep.subr.bf16.mxu0 0
  %1086 = vmatpush1.bf16.msra.mxu0 0
  %1087 = vmatprep.mubr.bf16.mxu0 0
  %1088 = vmatmul.mubr.bf16.gmra.mrb[0].mxu0 %v1050
  %v1089 = vpop.f32.mrb[0].mxu0
  %v1090 = vadd.f32 0.0, %v1089
  %v1091 = vpop.f32.mrb[0].mxu0
  %v1092 = vpop.f32.mrb[0].mxu0
  %v1093 = vadd.f32 0.0, %v1092
  %v1094 = vpop.f32.mrb[0].mxu0
  %1095 = vdwg.mxu0
  %v1096 = vld [vmem:[%s12] sm:$0x1]
  %v1098 = vlaneseq
  %v1099 = vshrl.u32 %v1098, 7
  %v1100 = vsub.s32 0, %v1099
  %v1101 = vrot.slane %v1096, %v1100
  %v1103 = vmul.f32 %v1090, %v1101
  %v1104 = vmul.f32 %v1093, %v1101
  %v1105 = vld [vmem:[%s13] sm:$0x1]
  %v1107 = vlaneseq
  %v1108 = vshrl.u32 %v1107, 7
  %v1109 = vsub.s32 0, %v1108
  %v1110 = vrot.slane %v1105, %v1109
  %v1112 = vadd.f32 %v1103, %v1110
  %v1113 = vadd.f32 %v1104, %v1110
  %v1114 = vadd.f32 %v1004, %v1112
  %v1115 = vadd.f32 %v1005, %v1113
  %v1116 = vmax.f32 %v1114, 0.0
  %v1117 = vmax.f32 %v1115, 0.0
  %1118 = vst [vmem:[#allocation2 + $0x1] sm:$0xff] %v1116
  %1119 = vst [vmem:[#allocation2 + $0x9] sm:$0xff] %v1117
  %v1120 = vld [vmem:[#allocation2] sm:$0xff]
  %v1121 = vld [vmem:[#allocation2 + $0x8] sm:$0xff]
  %v1122 = vld [vmem:[#allocation2 + $0x2] sm:$0xff]
  %v1123 = vld [vmem:[#allocation2 + $0xa] sm:$0xff]
  %v1124 = vsel %vm418, 0.0, %v1120
  %v1125 = vsel %vm419, 0.0, %v1121
  %v1126 = vpack.c.bf16 %v1125, %v1124
  %v1127 = vsel %vm425, 0.0, %v1122
  %v1128 = vsel %vm426, 0.0, %v1123
  %v1129 = vpack.c.bf16 %v1128, %v1127
  %v1130 = vld [vmem:[%s14] sm:$0xf]
  %v1131 = vld [vmem:[%s14 + $0x4] sm:$0xf]
  %v1132 = vld [vmem:[%s14 + $0x8] sm:$0xf]
  %v1133 = vld [vmem:[%s14 + $0xc] sm:$0xf]
  %v1134 = vld [vmem:[%s14 + $0x10] sm:$0xf]
  %v1135 = vld [vmem:[%s14 + $0x14] sm:$0xf]
  %v1136 = vld [vmem:[%s14 + $0x18] sm:$0xf]
  %v1137 = vld [vmem:[%s14 + $0x1c] sm:$0xf]
  %v1138 = vld [vmem:[%s14 + $0x20] sm:$0xf]
  %v1139 = vld [vmem:[%s14 + $0x24] sm:$0xf]
  %v1140 = vld [vmem:[%s14 + $0x28] sm:$0xf]
  %v1141 = vld [vmem:[%s14 + $0x2c] sm:$0xf]
  %v1142 = vld [vmem:[%s14 + $0x30] sm:$0xf]
  %v1143 = vld [vmem:[%s14 + $0x34] sm:$0xf]
  %v1144 = vld [vmem:[%s14 + $0x38] sm:$0xf]
  %v1145 = vld [vmem:[%s14 + $0x3c] sm:$0xf]
  %v1146 = vpack.c.bf16 %v1117, %v1116
  %s1147 = scalar_lea.vmem %s14, 64
  %v1148 = vld [vmem:[%s1147] sm:$0xf]
  %v1149 = vld [vmem:[%s1147 + $0x4] sm:$0xf]
  %v1150 = vld [vmem:[%s1147 + $0x8] sm:$0xf]
  %v1151 = vld [vmem:[%s1147 + $0xc] sm:$0xf]
  %v1152 = vld [vmem:[%s1147 + $0x10] sm:$0xf]
  %v1153 = vld [vmem:[%s1147 + $0x14] sm:$0xf]
  %v1154 = vld [vmem:[%s1147 + $0x18] sm:$0xf]
  %v1155 = vld [vmem:[%s1147 + $0x1c] sm:$0xf]
  %v1156 = vld [vmem:[%s1147 + $0x20] sm:$0xf]
  %v1157 = vld [vmem:[%s1147 + $0x24] sm:$0xf]
  %v1158 = vld [vmem:[%s1147 + $0x28] sm:$0xf]
  %v1159 = vld [vmem:[%s1147 + $0x2c] sm:$0xf]
  %v1160 = vld [vmem:[%s1147 + $0x30] sm:$0xf]
  %v1161 = vld [vmem:[%s1147 + $0x34] sm:$0xf]
  %v1162 = vld [vmem:[%s1147 + $0x38] sm:$0xf]
  %v1163 = vld [vmem:[%s1147 + $0x3c] sm:$0xf]
  %v1180 = vunpack.c.l.b16 %v1148
  %v1181 = vunpack.c.l.b16 %v1149
  %v1182 = vunpack.c.l.b16 %v1150
  %v1183 = vunpack.c.l.b16 %v1151
  %v1184 = vunpack.c.l.b16 %v1152
  %v1185 = vunpack.c.l.b16 %v1153
  %v1186 = vunpack.c.l.b16 %v1154
  %v1187 = vunpack.c.l.b16 %v1155
  %v1188 = vunpack.c.l.b16 %v1156
  %v1189 = vunpack.c.l.b16 %v1157
  %v1190 = vunpack.c.l.b16 %v1158
  %v1191 = vunpack.c.l.b16 %v1159
  %v1192 = vunpack.c.l.b16 %v1160
  %v1193 = vunpack.c.l.b16 %v1161
  %v1194 = vunpack.c.l.b16 %v1162
  %v1195 = vunpack.c.l.b16 %v1163
  %v1196 = vpack.c.b16 %v1181, %v1180
  %v1197 = vpack.c.b16 %v1183, %v1182
  %v1198 = vpack.c.b16 %v1185, %v1184
  %v1199 = vpack.c.b16 %v1187, %v1186
  %v1200 = vpack.c.b16 %v1189, %v1188
  %v1201 = vpack.c.b16 %v1191, %v1190
  %v1202 = vpack.c.b16 %v1193, %v1192
  %v1203 = vpack.c.b16 %v1195, %v1194
  %1212 = vmatprep.subr.bf16.mxu0 0
  %1213 = vmatpush1.bf16.msra.mxu0 %v1196
  %1214 = vmatprep.subr.bf16.mxu0 0
  %1215 = vmatpush1.bf16.msra.mxu0 %v1197
  %1216 = vmatprep.subr.bf16.mxu0 0
  %1217 = vmatpush1.bf16.msra.mxu0 %v1198
  %1218 = vmatprep.subr.bf16.mxu0 0
  %1219 = vmatpush1.bf16.msra.mxu0 %v1199
  %1220 = vmatprep.subr.bf16.mxu0 0
  %1221 = vmatpush1.bf16.msra.mxu0 %v1200
  %1222 = vmatprep.subr.bf16.mxu0 0
  %1223 = vmatpush1.bf16.msra.mxu0 %v1201
  %1224 = vmatprep.subr.bf16.mxu0 0
  %1225 = vmatpush1.bf16.msra.mxu0 %v1202
  %1226 = vmatprep.subr.bf16.mxu0 0
  %1227 = vmatpush1.bf16.msra.mxu0 %v1203
  %1228 = vmatprep.subr.bf16.mxu0 0
  %1229 = vmatpush1.bf16.msra.mxu0 0
  %1230 = vmatprep.subr.bf16.mxu0 0
  %1231 = vmatpush1.bf16.msra.mxu0 0
  %1232 = vmatprep.subr.bf16.mxu0 0
  %1233 = vmatpush1.bf16.msra.mxu0 0
  %1234 = vmatprep.subr.bf16.mxu0 0
  %1235 = vmatpush1.bf16.msra.mxu0 0
  %1236 = vmatprep.subr.bf16.mxu0 0
  %1237 = vmatpush1.bf16.msra.mxu0 0
  %1238 = vmatprep.subr.bf16.mxu0 0
  %1239 = vmatpush1.bf16.msra.mxu0 0
  %1240 = vmatprep.subr.bf16.mxu0 0
  %1241 = vmatpush1.bf16.msra.mxu0 0
  %1242 = vmatprep.subr.bf16.mxu0 0
  %1243 = vmatpush1.bf16.msra.mxu0 0
  %1244 = vmatprep.mubr.bf16.mxu0 0
  %1245 = vmatmul.mubr.bf16.gmra.mrb[0].mxu0 %v1146
  %v1246 = vpop.f32.mrb[0].mxu0
  %v1247 = vadd.f32 0.0, %v1246
  %v1248 = vpop.f32.mrb[0].mxu0
  %v1249 = vpop.f32.mrb[0].mxu0
  %v1250 = vadd.f32 0.0, %v1249
  %v1251 = vpop.f32.mrb[0].mxu0
  %1252 = vdwg.mxu0
  %v1269 = vunpack.c.l.b16 %v1130
  %v1270 = vunpack.c.l.b16 %v1131
  %v1271 = vunpack.c.l.b16 %v1132
  %v1272 = vunpack.c.l.b16 %v1133
  %v1273 = vunpack.c.l.b16 %v1134
  %v1274 = vunpack.c.l.b16 %v1135
  %v1275 = vunpack.c.l.b16 %v1136
  %v1276 = vunpack.c.l.b16 %v1137
  %v1277 = vunpack.c.l.b16 %v1138
  %v1278 = vunpack.c.l.b16 %v1139
  %v1279 = vunpack.c.l.b16 %v1140
  %v1280 = vunpack.c.l.b16 %v1141
  %v1281 = vunpack.c.l.b16 %v1142
  %v1282 = vunpack.c.l.b16 %v1143
  %v1283 = vunpack.c.l.b16 %v1144
  %v1284 = vunpack.c.l.b16 %v1145
  %v1285 = vpack.c.b16 %v1270, %v1269
  %v1286 = vpack.c.b16 %v1272, %v1271
  %v1287 = vpack.c.b16 %v1274, %v1273
  %v1288 = vpack.c.b16 %v1276, %v1275
  %v1289 = vpack.c.b16 %v1278, %v1277
  %v1290 = vpack.c.b16 %v1280, %v1279
  %v1291 = vpack.c.b16 %v1282, %v1281
  %v1292 = vpack.c.b16 %v1284, %v1283
  %1301 = vmatprep.subr.bf16.mxu0 0
  %1302 = vmatpush1.bf16.msra.mxu0 %v1285
  %1303 = vmatprep.subr.bf16.mxu0 0
  %1304 = vmatpush1.bf16.msra.mxu0 %v1286
  %1305 = vmatprep.subr.bf16.mxu0 0
  %1306 = vmatpush1.bf16.msra.mxu0 %v1287
  %1307 = vmatprep.subr.bf16.mxu0 0
  %1308 = vmatpush1.bf16.msra.mxu0 %v1288
  %1309 = vmatprep.subr.bf16.mxu0 0
  %1310 = vmatpush1.bf16.msra.mxu0 %v1289
  %1311 = vmatprep.subr.bf16.mxu0 0
  %1312 = vmatpush1.bf16.msra.mxu0 %v1290
  %1313 = vmatprep.subr.bf16.mxu0 0
  %1314 = vmatpush1.bf16.msra.mxu0 %v1291
  %1315 = vmatprep.subr.bf16.mxu0 0
  %1316 = vmatpush1.bf16.msra.mxu0 %v1292
  %1317 = vmatprep.subr.bf16.mxu0 0
  %1318 = vmatpush1.bf16.msra.mxu0 0
  %1319 = vmatprep.subr.bf16.mxu0 0
  %1320 = vmatpush1.bf16.msra.mxu0 0
  %1321 = vmatprep.subr.bf16.mxu0 0
  %1322 = vmatpush1.bf16.msra.mxu0 0
  %1323 = vmatprep.subr.bf16.mxu0 0
  %1324 = vmatpush1.bf16.msra.mxu0 0
  %1325 = vmatprep.subr.bf16.mxu0 0
  %1326 = vmatpush1.bf16.msra.mxu0 0
  %1327 = vmatprep.subr.bf16.mxu0 0
  %1328 = vmatpush1.bf16.msra.mxu0 0
  %1329 = vmatprep.subr.bf16.mxu0 0
  %1330 = vmatpush1.bf16.msra.mxu0 0
  %1331 = vmatprep.subr.bf16.mxu0 0
  %1332 = vmatpush1.bf16.msra.mxu0 0
  %1333 = vmatprep.mubr.bf16.mxu0 0
  %1334 = vmatmul.mubr.bf16.gmra.mrb[0].mxu0 %v1126
  %v1335 = vpop.f32.mrb[0].mxu0
  %v1336 = vadd.f32 %v1247, %v1335
  %v1337 = vpop.f32.mrb[0].mxu0
  %v1338 = vpop.f32.mrb[0].mxu0
  %v1339 = vadd.f32 %v1250, %v1338
  %v1340 = vpop.f32.mrb[0].mxu0
  %1341 = vdwg.mxu0
  %s1342 = scalar_lea.vmem %s14, 128
  %v1343 = vld [vmem:[%s1342] sm:$0xf]
  %v1344 = vld [vmem:[%s1342 + $0x4] sm:$0xf]
  %v1345 = vld [vmem:[%s1342 + $0x8] sm:$0xf]
  %v1346 = vld [vmem:[%s1342 + $0xc] sm:$0xf]
  %v1347 = vld [vmem:[%s1342 + $0x10] sm:$0xf]
  %v1348 = vld [vmem:[%s1342 + $0x14] sm:$0xf]
  %v1349 = vld [vmem:[%s1342 + $0x18] sm:$0xf]
  %v1350 = vld [vmem:[%s1342 + $0x1c] sm:$0xf]
  %v1351 = vld [vmem:[%s1342 + $0x20] sm:$0xf]
  %v1352 = vld [vmem:[%s1342 + $0x24] sm:$0xf]
  %v1353 = vld [vmem:[%s1342 + $0x28] sm:$0xf]
  %v1354 = vld [vmem:[%s1342 + $0x2c] sm:$0xf]
  %v1355 = vld [vmem:[%s1342 + $0x30] sm:$0xf]
  %v1356 = vld [vmem:[%s1342 + $0x34] sm:$0xf]
  %v1357 = vld [vmem:[%s1342 + $0x38] sm:$0xf]
  %v1358 = vld [vmem:[%s1342 + $0x3c] sm:$0xf]
  %v1375 = vunpack.c.l.b16 %v1343
  %v1376 = vunpack.c.l.b16 %v1344
  %v1377 = vunpack.c.l.b16 %v1345
  %v1378 = vunpack.c.l.b16 %v1346
  %v1379 = vunpack.c.l.b16 %v1347
  %v1380 = vunpack.c.l.b16 %v1348
  %v1381 = vunpack.c.l.b16 %v1349
  %v1382 = vunpack.c.l.b16 %v1350
  %v1383 = vunpack.c.l.b16 %v1351
  %v1384 = vunpack.c.l.b16 %v1352
  %v1385 = vunpack.c.l.b16 %v1353
  %v1386 = vunpack.c.l.b16 %v1354
  %v1387 = vunpack.c.l.b16 %v1355
  %v1388 = vunpack.c.l.b16 %v1356
  %v1389 = vunpack.c.l.b16 %v1357
  %v1390 = vunpack.c.l.b16 %v1358
  %v1391 = vpack.c.b16 %v1376, %v1375
  %v1392 = vpack.c.b16 %v1378, %v1377
  %v1393 = vpack.c.b16 %v1380, %v1379
  %v1394 = vpack.c.b16 %v1382, %v1381
  %v1395 = vpack.c.b16 %v1384, %v1383
  %v1396 = vpack.c.b16 %v1386, %v1385
  %v1397 = vpack.c.b16 %v1388, %v1387
  %v1398 = vpack.c.b16 %v1390, %v1389
  %1407 = vmatprep.subr.bf16.mxu0 0
  %1408 = vmatpush1.bf16.msra.mxu0 %v1391
  %1409 = vmatprep.subr.bf16.mxu0 0
  %1410 = vmatpush1.bf16.msra.mxu0 %v1392
  %1411 = vmatprep.subr.bf16.mxu0 0
  %1412 = vmatpush1.bf16.msra.mxu0 %v1393
  %1413 = vmatprep.subr.bf16.mxu0 0
  %1414 = vmatpush1.bf16.msra.mxu0 %v1394
  %1415 = vmatprep.subr.bf16.mxu0 0
  %1416 = vmatpush1.bf16.msra.mxu0 %v1395
  %1417 = vmatprep.subr.bf16.mxu0 0
  %1418 = vmatpush1.bf16.msra.mxu0 %v1396
  %1419 = vmatprep.subr.bf16.mxu0 0
  %1420 = vmatpush1.bf16.msra.mxu0 %v1397
  %1421 = vmatprep.subr.bf16.mxu0 0
  %1422 = vmatpush1.bf16.msra.mxu0 %v1398
  %1423 = vmatprep.subr.bf16.mxu0 0
  %1424 = vmatpush1.bf16.msra.mxu0 0
  %1425 = vmatprep.subr.bf16.mxu0 0
  %1426 = vmatpush1.bf16.msra.mxu0 0
  %1427 = vmatprep.subr.bf16.mxu0 0
  %1428 = vmatpush1.bf16.msra.mxu0 0
  %1429 = vmatprep.subr.bf16.mxu0 0
  %1430 = vmatpush1.bf16.msra.mxu0 0
  %1431 = vmatprep.subr.bf16.mxu0 0
  %1432 = vmatpush1.bf16.msra.mxu0 0
  %1433 = vmatprep.subr.bf16.mxu0 0
  %1434 = vmatpush1.bf16.msra.mxu0 0
  %1435 = vmatprep.subr.bf16.mxu0 0
  %1436 = vmatpush1.bf16.msra.mxu0 0
  %1437 = vmatprep.subr.bf16.mxu0 0
  %1438 = vmatpush1.bf16.msra.mxu0 0
  %1439 = vmatprep.mubr.bf16.mxu0 0
  %1440 = vmatmul.mubr.bf16.gmra.mrb[0].mxu0 %v1129
  %v1441 = vpop.f32.mrb[0].mxu0
  %v1442 = vadd.f32 0.0, %v1441
  %v1443 = vpop.f32.mrb[0].mxu0
  %v1444 = vpop.f32.mrb[0].mxu0
  %v1445 = vadd.f32 0.0, %v1444
  %v1446 = vpop.f32.mrb[0].mxu0
  %1447 = vdwg.mxu0
  %v1448 = vadd.f32 %v1336, %v1442
  %v1449 = vadd.f32 %v1339, %v1445
  %v1450 = vmax.f32 %v1448, 0.0
  %v1451 = vmax.f32 %v1449, 0.0
  %v1452 = vld [vmem:[%s15] sm:$0x1]
  %v1454 = vlaneseq
  %v1455 = vshrl.u32 %v1454, 7
  %v1456 = vsub.s32 0, %v1455
  %v1457 = vrot.slane %v1452, %v1456
  %v1459 = vmul.f32 %v1450, %v1457
  %v1460 = vmul.f32 %v1451, %v1457
  %v1461 = vld [vmem:[%s16] sm:$0x1]
  %v1463 = vlaneseq
  %v1464 = vshrl.u32 %v1463, 7
  %v1465 = vsub.s32 0, %v1464
  %v1466 = vrot.slane %v1461, %v1465
  %v1468 = vadd.f32 %v1459, %v1466
  %v1469 = vadd.f32 %v1460, %v1466
  %1470 = vst [vmem:[#allocation2 + $0x1] sm:$0xff] %v1468
  %1471 = vst [vmem:[#allocation2 + $0x9] sm:$0xff] %v1469
  %v1472 = vld [vmem:[#allocation2] sm:$0xff]
  %v1473 = vld [vmem:[#allocation2 + $0x8] sm:$0xff]
  %v1474 = vld [vmem:[#allocation2 + $0x2] sm:$0xff]
  %v1475 = vld [vmem:[#allocation2 + $0xa] sm:$0xff]
  %v1476 = vsel %vm418, 0.0, %v1472
  %v1477 = vsel %vm419, 0.0, %v1473
  %v1478 = vpack.c.bf16 %v1477, %v1476
  %v1479 = vsel %vm425, 0.0, %v1474
  %v1480 = vsel %vm426, 0.0, %v1475
  %v1481 = vpack.c.bf16 %v1480, %v1479
  %v1482 = vld [vmem:[%s17] sm:$0xf]
  %v1483 = vld [vmem:[%s17 + $0x4] sm:$0xf]
  %v1484 = vld [vmem:[%s17 + $0x8] sm:$0xf]
  %v1485 = vld [vmem:[%s17 + $0xc] sm:$0xf]
  %v1486 = vld [vmem:[%s17 + $0x10] sm:$0xf]
  %v1487 = vld [vmem:[%s17 + $0x14] sm:$0xf]
  %v1488 = vld [vmem:[%s17 + $0x18] sm:$0xf]
  %v1489 = vld [vmem:[%s17 + $0x1c] sm:$0xf]
  %v1490 = vld [vmem:[%s17 + $0x20] sm:$0xf]
  %v1491 = vld [vmem:[%s17 + $0x24] sm:$0xf]
  %v1492 = vld [vmem:[%s17 + $0x28] sm:$0xf]
  %v1493 = vld [vmem:[%s17 + $0x2c] sm:$0xf]
  %v1494 = vld [vmem:[%s17 + $0x30] sm:$0xf]
  %v1495 = vld [vmem:[%s17 + $0x34] sm:$0xf]
  %v1496 = vld [vmem:[%s17 + $0x38] sm:$0xf]
  %v1497 = vld [vmem:[%s17 + $0x3c] sm:$0xf]
  %v1498 = vpack.c.bf16 %v1469, %v1468
  %s1499 = scalar_lea.vmem %s17, 64
  %v1500 = vld [vmem:[%s1499] sm:$0xf]
  %v1501 = vld [vmem:[%s1499 + $0x4] sm:$0xf]
  %v1502 = vld [vmem:[%s1499 + $0x8] sm:$0xf]
  %v1503 = vld [vmem:[%s1499 + $0xc] sm:$0xf]
  %v1504 = vld [vmem:[%s1499 + $0x10] sm:$0xf]
  %v1505 = vld [vmem:[%s1499 + $0x14] sm:$0xf]
  %v1506 = vld [vmem:[%s1499 + $0x18] sm:$0xf]
  %v1507 = vld [vmem:[%s1499 + $0x1c] sm:$0xf]
  %v1508 = vld [vmem:[%s1499 + $0x20] sm:$0xf]
  %v1509 = vld [vmem:[%s1499 + $0x24] sm:$0xf]
  %v1510 = vld [vmem:[%s1499 + $0x28] sm:$0xf]
  %v1511 = vld [vmem:[%s1499 + $0x2c] sm:$0xf]
  %v1512 = vld [vmem:[%s1499 + $0x30] sm:$0xf]
  %v1513 = vld [vmem:[%s1499 + $0x34] sm:$0xf]
  %v1514 = vld [vmem:[%s1499 + $0x38] sm:$0xf]
  %v1515 = vld [vmem:[%s1499 + $0x3c] sm:$0xf]
  %v1532 = vunpack.c.l.b16 %v1500
  %v1533 = vunpack.c.l.b16 %v1501
  %v1534 = vunpack.c.l.b16 %v1502
  %v1535 = vunpack.c.l.b16 %v1503
  %v1536 = vunpack.c.l.b16 %v1504
  %v1537 = vunpack.c.l.b16 %v1505
  %v1538 = vunpack.c.l.b16 %v1506
  %v1539 = vunpack.c.l.b16 %v1507
  %v1540 = vunpack.c.l.b16 %v1508
  %v1541 = vunpack.c.l.b16 %v1509
  %v1542 = vunpack.c.l.b16 %v1510
  %v1543 = vunpack.c.l.b16 %v1511
  %v1544 = vunpack.c.l.b16 %v1512
  %v1545 = vunpack.c.l.b16 %v1513
  %v1546 = vunpack.c.l.b16 %v1514
  %v1547 = vunpack.c.l.b16 %v1515
  %v1548 = vpack.c.b16 %v1533, %v1532
  %v1549 = vpack.c.b16 %v1535, %v1534
  %v1550 = vpack.c.b16 %v1537, %v1536
  %v1551 = vpack.c.b16 %v1539, %v1538
  %v1552 = vpack.c.b16 %v1541, %v1540
  %v1553 = vpack.c.b16 %v1543, %v1542
  %v1554 = vpack.c.b16 %v1545, %v1544
  %v1555 = vpack.c.b16 %v1547, %v1546
  %1564 = vmatprep.subr.bf16.mxu0 0
  %1565 = vmatpush1.bf16.msra.mxu0 %v1548
  %1566 = vmatprep.subr.bf16.mxu0 0
  %1567 = vmatpush1.bf16.msra.mxu0 %v1549
  %1568 = vmatprep.subr.bf16.mxu0 0
  %1569 = vmatpush1.bf16.msra.mxu0 %v1550
  %1570 = vmatprep.subr.bf16.mxu0 0
  %1571 = vmatpush1.bf16.msra.mxu0 %v1551
  %1572 = vmatprep.subr.bf16.mxu0 0
  %1573 = vmatpush1.bf16.msra.mxu0 %v1552
  %1574 = vmatprep.subr.bf16.mxu0 0
  %1575 = vmatpush1.bf16.msra.mxu0 %v1553
  %1576 = vmatprep.subr.bf16.mxu0 0
  %1577 = vmatpush1.bf16.msra.mxu0 %v1554
  %1578 = vmatprep.subr.bf16.mxu0 0
  %1579 = vmatpush1.bf16.msra.mxu0 %v1555
  %1580 = vmatprep.subr.bf16.mxu0 0
  %1581 = vmatpush1.bf16.msra.mxu0 0
  %1582 = vmatprep.subr.bf16.mxu0 0
  %1583 = vmatpush1.bf16.msra.mxu0 0
  %1584 = vmatprep.subr.bf16.mxu0 0
  %1585 = vmatpush1.bf16.msra.mxu0 0
  %1586 = vmatprep.subr.bf16.mxu0 0
  %1587 = vmatpush1.bf16.msra.mxu0 0
  %1588 = vmatprep.subr.bf16.mxu0 0
  %1589 = vmatpush1.bf16.msra.mxu0 0
  %1590 = vmatprep.subr.bf16.mxu0 0
  %1591 = vmatpush1.bf16.msra.mxu0 0
  %1592 = vmatprep.subr.bf16.mxu0 0
  %1593 = vmatpush1.bf16.msra.mxu0 0
  %1594 = vmatprep.subr.bf16.mxu0 0
  %1595 = vmatpush1.bf16.msra.mxu0 0
  %1596 = vmatprep.mubr.bf16.mxu0 0
  %1597 = vmatmul.mubr.bf16.gmra.mrb[0].mxu0 %v1498
  %v1598 = vpop.f32.mrb[0].mxu0
  %v1599 = vadd.f32 0.0, %v1598
  %v1600 = vpop.f32.mrb[0].mxu0
  %v1601 = vpop.f32.mrb[0].mxu0
  %v1602 = vadd.f32 0.0, %v1601
  %v1603 = vpop.f32.mrb[0].mxu0
  %1604 = vdwg.mxu0
  %v1621 = vunpack.c.l.b16 %v1482
  %v1622 = vunpack.c.l.b16 %v1483
  %v1623 = vunpack.c.l.b16 %v1484
  %v1624 = vunpack.c.l.b16 %v1485
  %v1625 = vunpack.c.l.b16 %v1486
  %v1626 = vunpack.c.l.b16 %v1487
  %v1627 = vunpack.c.l.b16 %v1488
  %v1628 = vunpack.c.l.b16 %v1489
  %v1629 = vunpack.c.l.b16 %v1490
  %v1630 = vunpack.c.l.b16 %v1491
  %v1631 = vunpack.c.l.b16 %v1492
  %v1632 = vunpack.c.l.b16 %v1493
  %v1633 = vunpack.c.l.b16 %v1494
  %v1634 = vunpack.c.l.b16 %v1495
  %v1635 = vunpack.c.l.b16 %v1496
  %v1636 = vunpack.c.l.b16 %v1497
  %v1637 = vpack.c.b16 %v1622, %v1621
  %v1638 = vpack.c.b16 %v1624, %v1623
  %v1639 = vpack.c.b16 %v1626, %v1625
  %v1640 = vpack.c.b16 %v1628, %v1627
  %v1641 = vpack.c.b16 %v1630, %v1629
  %v1642 = vpack.c.b16 %v1632, %v1631
  %v1643 = vpack.c.b16 %v1634, %v1633
  %v1644 = vpack.c.b16 %v1636, %v1635
  %1653 = vmatprep.subr.bf16.mxu0 0
  %1654 = vmatpush1.bf16.msra.mxu0 %v1637
  %1655 = vmatprep.subr.bf16.mxu0 0
  %1656 = vmatpush1.bf16.msra.mxu0 %v1638
  %1657 = vmatprep.subr.bf16.mxu0 0
  %1658 = vmatpush1.bf16.msra.mxu0 %v1639
  %1659 = vmatprep.subr.bf16.mxu0 0
  %1660 = vmatpush1.bf16.msra.mxu0 %v1640
  %1661 = vmatprep.subr.bf16.mxu0 0
  %1662 = vmatpush1.bf16.msra.mxu0 %v1641
  %1663 = vmatprep.subr.bf16.mxu0 0
  %1664 = vmatpush1.bf16.msra.mxu0 %v1642
  %1665 = vmatprep.subr.bf16.mxu0 0
  %1666 = vmatpush1.bf16.msra.mxu0 %v1643
  %1667 = vmatprep.subr.bf16.mxu0 0
  %1668 = vmatpush1.bf16.msra.mxu0 %v1644
  %1669 = vmatprep.subr.bf16.mxu0 0
  %1670 = vmatpush1.bf16.msra.mxu0 0
  %1671 = vmatprep.subr.bf16.mxu0 0
  %1672 = vmatpush1.bf16.msra.mxu0 0
  %1673 = vmatprep.subr.bf16.mxu0 0
  %1674 = vmatpush1.bf16.msra.mxu0 0
  %1675 = vmatprep.subr.bf16.mxu0 0
  %1676 = vmatpush1.bf16.msra.mxu0 0
  %1677 = vmatprep.subr.bf16.mxu0 0
  %1678 = vmatpush1.bf16.msra.mxu0 0
  %1679 = vmatprep.subr.bf16.mxu0 0
  %1680 = vmatpush1.bf16.msra.mxu0 0
  %1681 = vmatprep.subr.bf16.mxu0 0
  %1682 = vmatpush1.bf16.msra.mxu0 0
  %1683 = vmatprep.subr.bf16.mxu0 0
  %1684 = vmatpush1.bf16.msra.mxu0 0
  %1685 = vmatprep.mubr.bf16.mxu0 0
  %1686 = vmatmul.mubr.bf16.gmra.mrb[0].mxu0 %v1478
  %v1687 = vpop.f32.mrb[0].mxu0
  %v1688 = vadd.f32 %v1599, %v1687
  %v1689 = vpop.f32.mrb[0].mxu0
  %v1690 = vpop.f32.mrb[0].mxu0
  %v1691 = vadd.f32 %v1602, %v1690
  %v1692 = vpop.f32.mrb[0].mxu0
  %1693 = vdwg.mxu0
  %s1694 = scalar_lea.vmem %s17, 128
  %v1695 = vld [vmem:[%s1694] sm:$0xf]
  %v1696 = vld [vmem:[%s1694 + $0x4] sm:$0xf]
  %v1697 = vld [vmem:[%s1694 + $0x8] sm:$0xf]
  %v1698 = vld [vmem:[%s1694 + $0xc] sm:$0xf]
  %v1699 = vld [vmem:[%s1694 + $0x10] sm:$0xf]
  %v1700 = vld [vmem:[%s1694 + $0x14] sm:$0xf]
  %v1701 = vld [vmem:[%s1694 + $0x18] sm:$0xf]
  %v1702 = vld [vmem:[%s1694 + $0x1c] sm:$0xf]
  %v1703 = vld [vmem:[%s1694 + $0x20] sm:$0xf]
  %v1704 = vld [vmem:[%s1694 + $0x24] sm:$0xf]
  %v1705 = vld [vmem:[%s1694 + $0x28] sm:$0xf]
  %v1706 = vld [vmem:[%s1694 + $0x2c] sm:$0xf]
  %v1707 = vld [vmem:[%s1694 + $0x30] sm:$0xf]
  %v1708 = vld [vmem:[%s1694 + $0x34] sm:$0xf]
  %v1709 = vld [vmem:[%s1694 + $0x38] sm:$0xf]
  %v1710 = vld [vmem:[%s1694 + $0x3c] sm:$0xf]
  %v1727 = vunpack.c.l.b16 %v1695
  %v1728 = vunpack.c.l.b16 %v1696
  %v1729 = vunpack.c.l.b16 %v1697
  %v1730 = vunpack.c.l.b16 %v1698
  %v1731 = vunpack.c.l.b16 %v1699
  %v1732 = vunpack.c.l.b16 %v1700
  %v1733 = vunpack.c.l.b16 %v1701
  %v1734 = vunpack.c.l.b16 %v1702
  %v1735 = vunpack.c.l.b16 %v1703
  %v1736 = vunpack.c.l.b16 %v1704
  %v1737 = vunpack.c.l.b16 %v1705
  %v1738 = vunpack.c.l.b16 %v1706
  %v1739 = vunpack.c.l.b16 %v1707
  %v1740 = vunpack.c.l.b16 %v1708
  %v1741 = vunpack.c.l.b16 %v1709
  %v1742 = vunpack.c.l.b16 %v1710
  %v1743 = vpack.c.b16 %v1728, %v1727
  %v1744 = vpack.c.b16 %v1730, %v1729
  %v1745 = vpack.c.b16 %v1732, %v1731
  %v1746 = vpack.c.b16 %v1734, %v1733
  %v1747 = vpack.c.b16 %v1736, %v1735
  %v1748 = vpack.c.b16 %v1738, %v1737
  %v1749 = vpack.c.b16 %v1740, %v1739
  %v1750 = vpack.c.b16 %v1742, %v1741
  %1759 = vmatprep.subr.bf16.mxu0 0
  %1760 = vmatpush1.bf16.msra.mxu0 %v1743
  %1761 = vmatprep.subr.bf16.mxu0 0
  %1762 = vmatpush1.bf16.msra.mxu0 %v1744
  %1763 = vmatprep.subr.bf16.mxu0 0
  %1764 = vmatpush1.bf16.msra.mxu0 %v1745
  %1765 = vmatprep.subr.bf16.mxu0 0
  %1766 = vmatpush1.bf16.msra.mxu0 %v1746
  %1767 = vmatprep.subr.bf16.mxu0 0
  %1768 = vmatpush1.bf16.msra.mxu0 %v1747
  %1769 = vmatprep.subr.bf16.mxu0 0
  %1770 = vmatpush1.bf16.msra.mxu0 %v1748
  %1771 = vmatprep.subr.bf16.mxu0 0
  %1772 = vmatpush1.bf16.msra.mxu0 %v1749
  %1773 = vmatprep.subr.bf16.mxu0 0
  %1774 = vmatpush1.bf16.msra.mxu0 %v1750
  %1775 = vmatprep.subr.bf16.mxu0 0
  %1776 = vmatpush1.bf16.msra.mxu0 0
  %1777 = vmatprep.subr.bf16.mxu0 0
  %1778 = vmatpush1.bf16.msra.mxu0 0
  %1779 = vmatprep.subr.bf16.mxu0 0
  %1780 = vmatpush1.bf16.msra.mxu0 0
  %1781 = vmatprep.subr.bf16.mxu0 0
  %1782 = vmatpush1.bf16.msra.mxu0 0
  %1783 = vmatprep.subr.bf16.mxu0 0
  %1784 = vmatpush1.bf16.msra.mxu0 0
  %1785 = vmatprep.subr.bf16.mxu0 0
  %1786 = vmatpush1.bf16.msra.mxu0 0
  %1787 = vmatprep.subr.bf16.mxu0 0
  %1788 = vmatpush1.bf16.msra.mxu0 0
  %1789 = vmatprep.subr.bf16.mxu0 0
  %1790 = vmatpush1.bf16.msra.mxu0 0
  %1791 = vmatprep.mubr.bf16.mxu0 0
  %1792 = vmatmul.mubr.bf16.gmra.mrb[0].mxu0 %v1481
  %v1793 = vpop.f32.mrb[0].mxu0
  %v1794 = vadd.f32 0.0, %v1793
  %v1795 = vpop.f32.mrb[0].mxu0
  %v1796 = vpop.f32.mrb[0].mxu0
  %v1797 = vadd.f32 0.0, %v1796
  %v1798 = vpop.f32.mrb[0].mxu0
  %1799 = vdwg.mxu0
  %v1800 = vadd.f32 %v1688, %v1794
  %v1801 = vadd.f32 %v1691, %v1797
  %v1802 = vld [vmem:[%s18] sm:$0x1]
  %v1804 = vlaneseq
  %v1805 = vshrl.u32 %v1804, 7
  %v1806 = vsub.s32 0, %v1805
  %v1807 = vrot.slane %v1802, %v1806
  %v1809 = vmul.f32 %v1800, %v1807
  %v1810 = vmul.f32 %v1801, %v1807
  %v1811 = vld [vmem:[%s19] sm:$0x1]
  %v1813 = vlaneseq
  %v1814 = vshrl.u32 %v1813, 7
  %v1815 = vsub.s32 0, %v1814
  %v1816 = vrot.slane %v1811, %v1815
  %v1818 = vadd.f32 %v1809, %v1816
  %v1819 = vadd.f32 %v1810, %v1816
  %v1820 = vrot.slane %v1818, 4
  %v1821 = vadd.f32 %v1818, %v1820
  %v1822 = vrot.slane %v1821, 2
  %v1823 = vadd.f32 %v1821, %v1822
  %v1824 = vrot.slane %v1823, 1
  %v1825 = vadd.f32 %v1823, %v1824
  %v1826 = vrot.slane %v1819, 4
  %v1827 = vadd.f32 %v1819, %v1826
  %v1828 = vrot.slane %v1827, 2
  %v1829 = vadd.f32 %v1827, %v1828
  %v1830 = vrot.slane %v1829, 1
  %v1831 = vadd.f32 %v1829, %v1830
  %v1832 = vld [vmem:[%s20] sm:$0xff]
  %v1833 = vld [vmem:[%s20 + $0x8] sm:$0xff]
  %v1834 = vld [vmem:[%s20 + $0x10] sm:$0xff]
  %v1835 = vld [vmem:[%s20 + $0x18] sm:$0xff]
  %v1836 = vld [vmem:[%s20 + $0x20] sm:$0xff]
  %v1837 = vld [vmem:[%s20 + $0x28] sm:$0xff]
  %v1838 = vld [vmem:[%s20 + $0x30] sm:$0xff]
  %v1839 = vld [vmem:[%s20 + $0x38] sm:$0xff]
  %v1840 = vld [vmem:[%s20 + $0x40] sm:$0xff]
  %v1841 = vld [vmem:[%s20 + $0x48] sm:$0xff]
  %v1842 = vld [vmem:[%s20 + $0x50] sm:$0xff]
  %v1843 = vld [vmem:[%s20 + $0x58] sm:$0xff]
  %v1844 = vld [vmem:[%s20 + $0x60] sm:$0xff]
  %v1845 = vld [vmem:[%s20 + $0x68] sm:$0xff]
  %v1846 = vld [vmem:[%s20 + $0x70] sm:$0xff]
  %v1847 = vld [vmem:[%s20 + $0x78] sm:$0xff]
  %v1848 = vld [vmem:[%s21] sm:$0x1]
  %v1850 = vlaneseq
  %v1851 = vshrl.u32 %v1850, 7
  %v1852 = vsub.s32 0, %v1851
  %v1853 = vrot.slane %v1848, %v1852
  %v1857 = vsel %vm805, %v1831, %v1825
  %1859 = vmatprep.subr.mxu0 0.0
  %1860 = vmatpush1.msra.mxu0 %v1832
  %1861 = vmatprep.subr.mxu0 0.0
  %1862 = vmatpush1.msra.mxu0 %v1833
  %1863 = vmatprep.subr.mxu0 0.0
  %1864 = vmatpush1.msra.mxu0 %v1834
  %1865 = vmatprep.subr.mxu0 0.0
  %1866 = vmatpush1.msra.mxu0 %v1835
  %1867 = vmatprep.subr.mxu0 0.0
  %1868 = vmatpush1.msra.mxu0 %v1836
  %1869 = vmatprep.subr.mxu0 0.0
  %1870 = vmatpush1.msra.mxu0 %v1837
  %1871 = vmatprep.subr.mxu0 0.0
  %1872 = vmatpush1.msra.mxu0 %v1838
  %1873 = vmatprep.subr.mxu0 0.0
  %1874 = vmatpush1.msra.mxu0 %v1839
  %1875 = vmatprep.subr.mxu0 0.0
  %1876 = vmatpush1.msra.mxu0 %v1840
  %1877 = vmatprep.subr.mxu0 0.0
  %1878 = vmatpush1.msra.mxu0 %v1841
  %1879 = vmatprep.subr.mxu0 0.0
  %1880 = vmatpush1.msra.mxu0 %v1842
  %1881 = vmatprep.subr.mxu0 0.0
  %1882 = vmatpush1.msra.mxu0 %v1843
  %1883 = vmatprep.subr.mxu0 0.0
  %1884 = vmatpush1.msra.mxu0 %v1844
  %1885 = vmatprep.subr.mxu0 0.0
  %1886 = vmatpush1.msra.mxu0 %v1845
  %1887 = vmatprep.subr.mxu0 0.0
  %1888 = vmatpush1.msra.mxu0 %v1846
  %1889 = vmatprep.subr.mxu0 0.0
  %1890 = vmatpush1.msra.mxu0 %v1847
  %1891 = vmatprep.subr.mxu0 0.0
  %1892 = vmatpush1.msra.mxu0 0.0
  %1893 = vmatprep.subr.mxu0 0.0
  %1894 = vmatpush1.msra.mxu0 0.0
  %1895 = vmatprep.subr.mxu0 0.0
  %1896 = vmatpush1.msra.mxu0 0.0
  %1897 = vmatprep.subr.mxu0 0.0
  %1898 = vmatpush1.msra.mxu0 0.0
  %1899 = vmatprep.subr.mxu0 0.0
  %1900 = vmatpush1.msra.mxu0 0.0
  %1901 = vmatprep.subr.mxu0 0.0
  %1902 = vmatpush1.msra.mxu0 0.0
  %1903 = vmatprep.subr.mxu0 0.0
  %1904 = vmatpush1.msra.mxu0 0.0
  %1905 = vmatprep.subr.mxu0 0.0
  %1906 = vmatpush1.msra.mxu0 0.0
  %1907 = vmatprep.subr.mxu0 0.0
  %1908 = vmatpush1.msra.mxu0 0.0
  %1909 = vmatprep.subr.mxu0 0.0
  %1910 = vmatpush1.msra.mxu0 0.0
  %1911 = vmatprep.subr.mxu0 0.0
  %1912 = vmatpush1.msra.mxu0 0.0
  %1913 = vmatprep.subr.mxu0 0.0
  %1914 = vmatpush1.msra.mxu0 0.0
  %1915 = vmatprep.subr.mxu0 0.0
  %1916 = vmatpush1.msra.mxu0 0.0
  %1917 = vmatprep.subr.mxu0 0.0
  %1918 = vmatpush1.msra.mxu0 0.0
  %1919 = vmatprep.subr.mxu0 0.0
  %1920 = vmatpush1.msra.mxu0 0.0
  %1921 = vmatprep.subr.mxu0 0.0
  %1922 = vmatpush1.msra.mxu0 0.0
  %1923 = vmatprep.mubr.f32.mxu0 0.0
  %1924 = vmatmul.mubr.f32.gmra.mrb[0].mxu0 %v1857
  %v1925 = vpop.f32.mrb[0].mxu0
  %v1926 = vadd.f32 %v1853, %v1925
  %v1927 = vpop.f32.mrb[0].mxu0
  %1928 = vdwg.mxu0
  %v1929 = vmax.f32 %v1926, 0.0
  %v1930 = vld [vmem:[%s22] sm:$0x3]
  %v1931 = vld [vmem:[%s23] sm:$0x1]
  %v1933 = vlaneseq
  %v1934 = vshrl.u32 %v1933, 7
  %v1935 = vsub.s32 0, %v1934
  %v1936 = vrot.slane %v1931, %v1935
  %v1939 = vsel %vm887, %v1929, 0
  %v1942 = vsel %vm891, %v1930, 0
  %1944 = vmatprep.subr.mxu0 0.0
  %1945 = vmatpush1.msra.mxu0 %v1942
  %1946 = vmatprep.subr.mxu0 0.0
  %1947 = vmatpush1.msra.mxu0 0.0
  %1948 = vmatprep.subr.mxu0 0.0
  %1949 = vmatpush1.msra.mxu0 0.0
  %1950 = vmatprep.subr.mxu0 0.0
  %1951 = vmatpush1.msra.mxu0 0.0
  %1952 = vmatprep.subr.mxu0 0.0
  %1953 = vmatpush1.msra.mxu0 0.0
  %1954 = vmatprep.subr.mxu0 0.0
  %1955 = vmatpush1.msra.mxu0 0.0
  %1956 = vmatprep.subr.mxu0 0.0
  %1957 = vmatpush1.msra.mxu0 0.0
  %1958 = vmatprep.subr.mxu0 0.0
  %1959 = vmatpush1.msra.mxu0 0.0
  %1960 = vmatprep.subr.mxu0 0.0
  %1961 = vmatpush1.msra.mxu0 0.0
  %1962 = vmatprep.subr.mxu0 0.0
  %1963 = vmatpush1.msra.mxu0 0.0
  %1964 = vmatprep.subr.mxu0 0.0
  %1965 = vmatpush1.msra.mxu0 0.0
  %1966 = vmatprep.subr.mxu0 0.0
  %1967 = vmatpush1.msra.mxu0 0.0
  %1968 = vmatprep.subr.mxu0 0.0
  %1969 = vmatpush1.msra.mxu0 0.0
  %1970 = vmatprep.subr.mxu0 0.0
  %1971 = vmatpush1.msra.mxu0 0.0
  %1972 = vmatprep.subr.mxu0 0.0
  %1973 = vmatpush1.msra.mxu0 0.0
  %1974 = vmatprep.subr.mxu0 0.0
  %1975 = vmatpush1.msra.mxu0 0.0
  %1976 = vmatprep.subr.mxu0 0.0
  %1977 = vmatpush1.msra.mxu0 0.0
  %1978 = vmatprep.subr.mxu0 0.0
  %1979 = vmatpush1.msra.mxu0 0.0
  %1980 = vmatprep.subr.mxu0 0.0
  %1981 = vmatpush1.msra.mxu0 0.0
  %1982 = vmatprep.subr.mxu0 0.0
  %1983 = vmatpush1.msra.mxu0 0.0
  %1984 = vmatprep.subr.mxu0 0.0
  %1985 = vmatpush1.msra.mxu0 0.0
  %1986 = vmatprep.subr.mxu0 0.0
  %1987 = vmatpush1.msra.mxu0 0.0
  %1988 = vmatprep.subr.mxu0 0.0
  %1989 = vmatpush1.msra.mxu0 0.0
  %1990 = vmatprep.subr.mxu0 0.0
  %1991 = vmatpush1.msra.mxu0 0.0
  %1992 = vmatprep.subr.mxu0 0.0
  %1993 = vmatpush1.msra.mxu0 0.0
  %1994 = vmatprep.subr.mxu0 0.0
  %1995 = vmatpush1.msra.mxu0 0.0
  %1996 = vmatprep.subr.mxu0 0.0
  %1997 = vmatpush1.msra.mxu0 0.0
  %1998 = vmatprep.subr.mxu0 0.0
  %1999 = vmatpush1.msra.mxu0 0.0
  %2000 = vmatprep.subr.mxu0 0.0
  %2001 = vmatpush1.msra.mxu0 0.0
  %2002 = vmatprep.subr.mxu0 0.0
  %2003 = vmatpush1.msra.mxu0 0.0
  %2004 = vmatprep.subr.mxu0 0.0
  %2005 = vmatpush1.msra.mxu0 0.0
  %2006 = vmatprep.subr.mxu0 0.0
  %2007 = vmatpush1.msra.mxu0 0.0
  %2008 = vmatprep.mubr.f32.mxu0 0.0
  %2009 = vmatmul.mubr.f32.gmra.mrb[0].mxu0 %v1939
  %v2010 = vpop.f32.mrb[0].mxu0
  %v2011 = vadd.f32 %v1936, %v2010
  %v2012 = vpop.f32.mrb[0].mxu0
  %2013 = vdwg.mxu0
  %v2014 = vsub.f32 0.0, %v2011
  %v2015 = vmul.f32 %v2014, 1.442695
  %v2016 = vpow.pop %v2015
  %v2017 = vadd.f32 %v2016, 1.0
  %v2018 = vrcp.pop %v2017
  %v2019 = vmul.f32 1.0, %v2018
  %v2022 = vunpack.c.l.s4 1966171168
  %v2023 = vunpack.c.0.s8 %v2022
  %v2024 = vlaneseq
  %v2025 = vshrl.u32 %v2024, 7
  %v2026 = vsub.s32 %v2023, %v2025
  %v2027 = vrot.slane %v2019, %v2026
  %v2028 = vcombine.high %v2027, %v2027
  %v2030 = vunpack.c.l.s4 1966171168
  %v2031 = vunpack.c.0.s8 %v2030
  %v2032 = vlaneseq
  %v2033 = vshrl.u32 %v2032, 7
  %v2034 = vsub.s32 %v2031, %v2033
  %v2035 = vrot.slane %v2027, %v2034
  %v2037 = vunpack.c.l.s4 1966171168
  %v2038 = vunpack.c.0.s8 %v2037
  %v2039 = vlaneseq
  %v2040 = vshrl.u32 %v2039, 7
  %v2041 = vsub.s32 %v2038, %v2040
  %v2042 = vrot.slane %v2028, %v2041
  %v2043 = vlaneseq
  %v2044 = vshrl.u32 %v2043, 7
  %v2045 = vsub.s32 0, %v2044
  %v2046 = vrot.slane %v2035, %v2045
  %v2047 = vlaneseq
  %v2048 = vshrl.u32 %v2047, 7
  %v2049 = vsub.s32 0, %v2048
  %v2050 = vrot.slane %v2042, %v2049
  %v2053 = vmul.f32 %v1818, %v2046
  %v2054 = vmul.f32 %v1819, %v2050
  %v2055 = vadd.f32 %v2053, %v1116
  %v2056 = vadd.f32 %v2054, %v1117
  %v2057 = vmax.f32 %v2055, 0.0
  %v2058 = vmax.f32 %v2056, 0.0
  %2059 = vst [vmem:[%s24] sm:$0xff] %v2057
  %2060 = vst [vmem:[%s24 + $0x8] sm:$0xff] %v2058
  // Predicated region
  $region98: #{_lambda_.1} parent=0 // pred_check
    _
  $region99: #{_lambda_.1} parent=0 // pred_check_branch
    %2062 = sbr.rel (0) target = $region101
  $region100: #{_lambda_.1} parent=0 // pred_region
    _
  $region101: #{_lambda_.1} parent=0 // pred_fallthru
    _
  // Predicated region
  $region102: #{_lambda_.1} parent=0 // pred_check
    _
  $region103: #{_lambda_.1} parent=0 // pred_check_branch
    %2064 = sbr.rel (0) target = $region105
  $region104: #{_lambda_.1} parent=0 // pred_region
    _
  $region105: #{_lambda_.1} parent=0 // pred_fallthru
    _

</llo_original>
